<compile_context>
chip_gen: v5e
topology: v5e:2x2
jax: 0.10.0
libtpu: 0.0.40
codegen_flags: <defaults>
</compile_context>

<pallas_src>
import jax
import jax.numpy as jnp
from jax import lax
from jax.experimental import pallas as pl
from jax.experimental.pallas import tpu as pltpu


# ---------------------------------------------------------------------------
# Helpers
# ---------------------------------------------------------------------------
def _zero_halo(ref):
    """Zero only the 1-pixel halo (rows 0, H+1 and cols 0, W+1) of a
    (nb, H+2, W+2, C) scratch ref. Done every grid step so it is correct even
    when the parallel grid axis is split across TensorCores (each core owns
    its own scratch and may never see program_id == 0)."""
    nb, hp, wp, c = ref.shape
    ref[:, 0:1, :, :] = jnp.zeros((nb, 1, wp, c), ref.dtype)
    ref[:, hp - 1:hp, :, :] = jnp.zeros((nb, 1, wp, c), ref.dtype)
    ref[:, :, 0:1, :] = jnp.zeros((nb, hp, 1, c), ref.dtype)
    ref[:, :, wp - 1:wp, :] = jnp.zeros((nb, hp, 1, c), ref.dtype)


# ---------------------------------------------------------------------------
# Fused Pallas kernel: maxpool 2x2 -> conv3x3+ReLU -> conv3x3+ReLU
# ---------------------------------------------------------------------------
def _down_fused_kernel(x_ref, w1_ref, b1_ref, w2_ref, b2_ref, o_ref,
                       pad1_ref, pad2_ref):
    """
    x_ref   : (nb, HH, 2, WW, 2*Cin)  NHWC input, 2x2 pooling window exposed
                                      as a size-2 row axis + channel "halves"
    w1_ref  : (9*Cin, C1)  bf16       conv1 weights, row = (dy*3+dx)*Cin + ci
    b1_ref  : (1, C1)      f32        conv1 bias
    w2_ref  : (9*C1, C2)   bf16       conv2 weights
    b2_ref  : (1, C2)      f32        conv2 bias
    o_ref   : (nb, C2, HH*WW)         output (flattened spatial on lanes)
    pad1_ref: (nb, HH+2, WW+2, Cin)   f32 scratch: halo-padded pooled act.
    pad2_ref: (nb, HH+2, WW+2, C1)    f32 scratch: halo-padded conv1 act.
    """
    nb, hh, _, ww, _ = x_ref.shape
    cin = pad1_ref.shape[-1]
    c1 = pad2_ref.shape[-1]
    m = nb * hh * ww

    # ---- 2x2 / stride-2 max pool (pure VPU, no strided slicing) ------------
    xa = x_ref[...]                                     # (nb,HH,2,WW,2*Cin)
    v = jnp.maximum(xa[:, :, 0], xa[:, :, 1])           # max over row pair
    pooled = jnp.maximum(v[..., :cin], v[..., cin:])    # max over col pair
    # pooled: (nb, HH, WW, Cin)

    # ---- conv1 (3x3, pad=1) + ReLU: im2col -> single bf16 MXU dot ----------
    _zero_halo(pad1_ref)
    pad1_ref[:, 1:hh + 1, 1:ww + 1, :] = pooled.astype(pad1_ref.dtype)
    cols = [pad1_ref[:, dy:dy + hh, dx:dx + ww, :]
            for dy in range(3) for dx in range(3)]
    col1 = jnp.concatenate(cols, axis=-1).reshape(m, 9 * cin)
    y1 = jnp.dot(col1.astype(jnp.bfloat16), w1_ref[...],
                 preferred_element_type=jnp.float32)    # (M, C1) f32 acc
    y1 = jnp.maximum(y1 + b1_ref[...], 0.0)

    # ---- conv2 (3x3, pad=1) + ReLU ------------------------------------------
    _zero_halo(pad2_ref)
    pad2_ref[:, 1:hh + 1, 1:ww + 1, :] = (
        y1.reshape(nb, hh, ww, c1).astype(pad2_ref.dtype))
    cols = [pad2_ref[:, dy:dy + hh, dx:dx + ww, :]
            for dy in range(3) for dx in range(3)]
    col2 = jnp.concatenate(cols, axis=-1).reshape(m, 9 * c1)
    y2 = jnp.dot(col2.astype(jnp.bfloat16), w2_ref[...],
                 preferred_element_type=jnp.float32)    # (M, C2) f32 acc
    y2 = jnp.maximum(y2 + b2_ref[...], 0.0)

    # ---- store as (nb, C2, HH*WW): spatial on lanes, no channel padding ----
    m_img = hh * ww
    y2r = y2.reshape(nb, m_img, y2.shape[-1])
    for b in range(nb):                                 # nb is static & small
        o_ref[b] = y2r[b].T.astype(o_ref.dtype)


# ---------------------------------------------------------------------------
# Wrapper
# ---------------------------------------------------------------------------
def down_forward(x_nchw, params):
    """Down(in_ch, out_ch): MaxPool2d(2) -> DoubleConv (two 3x3 conv + ReLU)."""
    w1, b1, w2, b2 = params
    n, cin, h, w = x_nchw.shape
    assert h % 2 == 0 and w % 2 == 0, "fused Down kernel expects even H, W"
    hh, ww = h // 2, w // 2
    c1, c2 = w1.shape[0], w2.shape[0]
    m_img = hh * ww

    # Fold images per grid step (bigger matmul M), but keep >= 2 grid steps
    # when possible (v7x has 2 TensorCores) and bound the VMEM footprint.
    nb = 1
    for d in range(n, 0, -1):
        if n % d == 0 and (n // d >= 2 or d == 1) and d * m_img <= 2048:
            nb = d
            break
    grid = (n // nb,)

    # NCHW -> NHWC (one XLA transpose), then a FREE contiguous reshape that
    # exposes the 2x2 pooling window: x5[n, y, r, x, s*Cin + c] = x[n, c, 2y+r, 2x+s].
    x_nhwc = jnp.transpose(x_nchw, (0, 2, 3, 1))
    x5 = x_nhwc.reshape(n, hh, 2, ww, 2 * cin)

    # Conv weights flattened to (9*Cin, Cout) with row order (dy, dx, ci) to
    # match the in-kernel im2col column order; cast once to bf16 for the MXU.
    w1_mat = jnp.transpose(w1, (2, 3, 1, 0)).reshape(9 * cin, c1).astype(jnp.bfloat16)
    b1_mat = b1.reshape(1, c1).astype(jnp.float32)
    w2_mat = jnp.transpose(w2, (2, 3, 1, 0)).reshape(9 * c1, c2).astype(jnp.bfloat16)
    b2_mat = b2.reshape(1, c2).astype(jnp.float32)

    # Explicit VMEM budget (v5e scoped default is only 16 MiB).
    itemsize = x_nchw.dtype.itemsize
    in_blk = nb * hh * 2 * ww * 2 * cin * itemsize
    out_blk = nb * c2 * m_img * itemsize
    scratch_b = nb * (hh + 2) * (ww + 2) * (cin + c1) * 4
    weights_b = (9 * cin * c1 + 9 * c1 * c2) * 2 + (c1 + c2) * 4
    vmem_est = 2 * (in_blk + out_blk) + scratch_b + weights_b
    vmem_limit = int(min(max(4 * vmem_est, 32 * 1024 * 1024), 64 * 1024 * 1024))

    out = pl.pallas_call(
        _down_fused_kernel,
        out_shape=jax.ShapeDtypeStruct((n, c2, m_img), x_nchw.dtype),
        grid=grid,
        in_specs=[
            pl.BlockSpec((nb, hh, 2, ww, 2 * cin), lambda i: (i, 0, 0, 0, 0)),
            pl.BlockSpec(memory_space=pltpu.MemorySpace.VMEM),  # w1 (grid-invariant)
            pl.BlockSpec(memory_space=pltpu.MemorySpace.VMEM),  # b1
            pl.BlockSpec(memory_space=pltpu.MemorySpace.VMEM),  # w2
            pl.BlockSpec(memory_space=pltpu.MemorySpace.VMEM),  # b2
        ],
        out_specs=pl.BlockSpec((nb, c2, m_img), lambda i: (i, 0, 0)),
        scratch_shapes=[
            pltpu.VMEM((nb, hh + 2, ww + 2, cin), jnp.float32),
            pltpu.VMEM((nb, hh + 2, ww + 2, c1), jnp.float32),
        ],
        compiler_params=pltpu.CompilerParams(
            dimension_semantics=("parallel",),
            vmem_limit_bytes=vmem_limit),
    )(x5, w1_mat, b1_mat, w2_mat, b2_mat)

    # (N, C2, HH*WW) -> (N, C2, HH, WW): contiguous reshape only, no transpose.
    return out.reshape(n, c2, hh, ww)


# ---------------------------------------------------------------------------
# Pure-JAX reference (for correctness checking only)
# ---------------------------------------------------------------------------
def down_reference(x_nchw, params):
    w1, b1, w2, b2 = params
    x = lax.reduce_window(x_nchw, -jnp.inf, lax.max,
                          (1, 1, 2, 2), (1, 1, 2, 2), "VALID")
    dn1 = lax.conv_dimension_numbers(x.shape, w1.shape,
                                     ("NCHW", "OIHW", "NCHW"))
    y = lax.conv_general_dilated(x, w1, (1, 1), ((1, 1), (1, 1)),
                                 dimension_numbers=dn1,
                                 precision=lax.Precision.HIGHEST)
    y = jnp.maximum(y + b1[None, :, None, None], 0.0)
    dn2 = lax.conv_dimension_numbers(y.shape, w2.shape,
                                     ("NCHW", "OIHW", "NCHW"))
    y = lax.conv_general_dilated(y, w2, (1, 1), ((1, 1), (1, 1)),
                                 dimension_numbers=dn2,
                                 precision=lax.Precision.HIGHEST)
    y = jnp.maximum(y + b2[None, :, None, None], 0.0)
    return y


# ---------------------------------------------------------------------------
# Main
# ---------------------------------------------------------------------------
if __name__ == "__main__":
    in_channels, out_channels = 4, 8
    N, H, W = 2, 16, 16

    key = jax.random.PRNGKey(0)
    kx, kw1, kb1, kw2, kb2 = jax.random.split(key, 5)

    x = jax.random.normal(kx, (N, in_channels, H, W), dtype=jnp.float32)

    # Deterministic parameter init (PyTorch OIHW conv-weight layout, fan-in scaled).
    fan1 = in_channels * 9
    w1 = jax.random.normal(kw1, (out_channels, in_channels, 3, 3),
                           dtype=jnp.float32) / jnp.sqrt(fan1)
    b1 = jax.random.normal(kb1, (out_channels,), dtype=jnp.float32) * 0.1
    fan2 = out_channels * 9
    w2 = jax.random.normal(kw2, (out_channels, out_channels, 3, 3),
                           dtype=jnp.float32) / jnp.sqrt(fan2)
    b2 = jax.random.normal(kb2, (out_channels,), dtype=jnp.float32) * 0.1
    params = (w1, b1, w2, b2)

    out = jax.block_until_ready(down_forward(x, params))
    assert out.shape == (N, out_channels, H // 2, W // 2), out.shape

    ref = jax.block_until_ready(down_reference(x, params))
    max_err = float(jnp.max(jnp.abs(out - ref)))
    # bf16 MXU operands (f32 accumulation) vs an f32 HIGHEST-precision
    # reference -> tolerance loosened accordingly.
    assert jnp.allclose(out, ref, atol=2e-2, rtol=2e-2), max_err

    print("KERNEL_OK")
</pallas_src>

<mosaic_0001>
module attributes {stable_mosaic.version = 11 : i64} {
  func.func @_down_fused_kernel(%arg0: i32, %arg1: memref<1x8x2x8x8xf32, #tpu.memory_space<vmem>>, %arg2: memref<36x8xbf16, #tpu.memory_space<vmem>>, %arg3: memref<1x8xf32, #tpu.memory_space<vmem>>, %arg4: memref<72x8xbf16, #tpu.memory_space<vmem>>, %arg5: memref<1x8xf32, #tpu.memory_space<vmem>>, %arg6: memref<1x8x64xf32, #tpu.memory_space<vmem>>, %arg7: memref<1x10x10x4xf32, #tpu.memory_space<vmem>>, %arg8: memref<1x10x10x8xf32, #tpu.memory_space<vmem>>) attributes {dimension_semantics = [#tpu.dimension_semantics<parallel>], iteration_bounds = array<i64: 2>, scalar_prefetch = 0 : i64, scratch_operands = 2 : i64, tpu.core_type = #tpu.core_type<tc>, window_params = [{transform_indices = @transform_0, window_bounds = array<i64: 1, 8, 2, 8, 8>}, {pipeline_mode = #tpu.pipeline_mode<synchronous>, transform_indices = @transform_1, window_bounds = array<i64: 36, 8>}, {pipeline_mode = #tpu.pipeline_mode<synchronous>, transform_indices = @transform_2, window_bounds = array<i64: 1, 8>}, {pipeline_mode = #tpu.pipeline_mode<synchronous>, transform_indices = @transform_3, window_bounds = array<i64: 72, 8>}, {pipeline_mode = #tpu.pipeline_mode<synchronous>, transform_indices = @transform_4, window_bounds = array<i64: 1, 8>}, {transform_indices = @transform_5, window_bounds = array<i64: 1, 8, 64>}]} {
    %c0 = arith.constant 0 : index
    %c0_0 = arith.constant 0 : index
    %c0_1 = arith.constant 0 : index
    %c0_2 = arith.constant 0 : index
    %c0_3 = arith.constant 0 : index
    %0 = vector.load %arg1[%c0, %c0_0, %c0_1, %c0_2, %c0_3] : memref<1x8x2x8x8xf32, #tpu.memory_space<vmem>>, vector<1x8x2x8x8xf32>
    %1 = vector.extract_strided_slice %0 {offsets = [0, 0, 0, 0, 0], sizes = [1, 8, 1, 8, 8], strides = [1, 1, 1, 1, 1]} : vector<1x8x2x8x8xf32> to vector<1x8x1x8x8xf32>
    %2 = vector.shape_cast %1 : vector<1x8x1x8x8xf32> to vector<1x8x8x8xf32>
    %3 = vector.extract_strided_slice %0 {offsets = [0, 0, 1, 0, 0], sizes = [1, 8, 1, 8, 8], strides = [1, 1, 1, 1, 1]} : vector<1x8x2x8x8xf32> to vector<1x8x1x8x8xf32>
    %4 = vector.shape_cast %3 : vector<1x8x1x8x8xf32> to vector<1x8x8x8xf32>
    %5 = arith.maximumf %2, %4 : vector<1x8x8x8xf32>
    %6 = vector.extract_strided_slice %5 {offsets = [0, 0, 0, 0], sizes = [1, 8, 8, 4], strides = [1, 1, 1, 1]} : vector<1x8x8x8xf32> to vector<1x8x8x4xf32>
    %7 = vector.extract_strided_slice %5 {offsets = [0, 0, 0, 4], sizes = [1, 8, 8, 4], strides = [1, 1, 1, 1]} : vector<1x8x8x8xf32> to vector<1x8x8x4xf32>
    %8 = arith.maximumf %6, %7 : vector<1x8x8x4xf32>
    %cst = arith.constant 0.000000e+00 : f32
    %9 = vector.broadcast %cst : f32 to vector<1x1x10x4xf32>
    %c0_4 = arith.constant 0 : index
    %c0_5 = arith.constant 0 : index
    %c0_6 = arith.constant 0 : index
    %c0_7 = arith.constant 0 : index
    %10 = vector.load %arg7[%c0_4, %c0_5, %c0_6, %c0_7] : memref<1x10x10x4xf32, #tpu.memory_space<vmem>>, vector<1x1x10x4xf32>
    tpu.vector_store %arg7[%c0_4, %c0_5, %c0_6, %c0_7], %9 {strides = array<i32>} : memref<1x10x10x4xf32, #tpu.memory_space<vmem>>, vector<1x1x10x4xf32>,
    %cst_8 = arith.constant 0.000000e+00 : f32
    %11 = vector.broadcast %cst_8 : f32 to vector<1x1x10x4xf32>
    %c0_9 = arith.constant 0 : index
    %c9 = arith.constant 9 : index
    %c0_10 = arith.constant 0 : index
    %c0_11 = arith.constant 0 : index
    %12 = vector.load %arg7[%c0_9, %c9, %c0_10, %c0_11] : memref<1x10x10x4xf32, #tpu.memory_space<vmem>>, vector<1x1x10x4xf32>
    tpu.vector_store %arg7[%c0_9, %c9, %c0_10, %c0_11], %11 {strides = array<i32>} : memref<1x10x10x4xf32, #tpu.memory_space<vmem>>, vector<1x1x10x4xf32>,
    %cst_12 = arith.constant 0.000000e+00 : f32
    %13 = vector.broadcast %cst_12 : f32 to vector<1x10x1x4xf32>
    %c0_13 = arith.constant 0 : index
    %c0_14 = arith.constant 0 : index
    %c0_15 = arith.constant 0 : index
    %c0_16 = arith.constant 0 : index
    %14 = vector.load %arg7[%c0_13, %c0_14, %c0_15, %c0_16] : memref<1x10x10x4xf32, #tpu.memory_space<vmem>>, vector<1x10x1x4xf32>
    tpu.vector_store %arg7[%c0_13, %c0_14, %c0_15, %c0_16], %13 {strides = array<i32>} : memref<1x10x10x4xf32, #tpu.memory_space<vmem>>, vector<1x10x1x4xf32>,
    %cst_17 = arith.constant 0.000000e+00 : f32
    %15 = vector.broadcast %cst_17 : f32 to vector<1x10x1x4xf32>
    %c0_18 = arith.constant 0 : index
    %c0_19 = arith.constant 0 : index
    %c9_20 = arith.constant 9 : index
    %c0_21 = arith.constant 0 : index
    %16 = vector.load %arg7[%c0_18, %c0_19, %c9_20, %c0_21] : memref<1x10x10x4xf32, #tpu.memory_space<vmem>>, vector<1x10x1x4xf32>
    tpu.vector_store %arg7[%c0_18, %c0_19, %c9_20, %c0_21], %15 {strides = array<i32>} : memref<1x10x10x4xf32, #tpu.memory_space<vmem>>, vector<1x10x1x4xf32>,
    %c0_22 = arith.constant 0 : index
    %c1 = arith.constant 1 : index
    %c1_23 = arith.constant 1 : index
    %c0_24 = arith.constant 0 : index
    %17 = vector.load %arg7[%c0_22, %c1, %c1_23, %c0_24] : memref<1x10x10x4xf32, #tpu.memory_space<vmem>>, vector<1x8x8x4xf32>
    tpu.vector_store %arg7[%c0_22, %c1, %c1_23, %c0_24], %8 {strides = array<i32>} : memref<1x10x10x4xf32, #tpu.memory_space<vmem>>, vector<1x8x8x4xf32>,
    %c0_25 = arith.constant 0 : index
    %c0_26 = arith.constant 0 : index
    %c0_27 = arith.constant 0 : index
    %c0_28 = arith.constant 0 : index
    %18 = vector.load %arg7[%c0_25, %c0_26, %c0_27, %c0_28] : memref<1x10x10x4xf32, #tpu.memory_space<vmem>>, vector<1x8x8x4xf32>
    %c0_29 = arith.constant 0 : index
    %c0_30 = arith.constant 0 : index
    %c1_31 = arith.constant 1 : index
    %c0_32 = arith.constant 0 : index
    %19 = vector.load %arg7[%c0_29, %c0_30, %c1_31, %c0_32] : memref<1x10x10x4xf32, #tpu.memory_space<vmem>>, vector<1x8x8x4xf32>
    %c0_33 = arith.constant 0 : index
    %c0_34 = arith.constant 0 : index
    %c2 = arith.constant 2 : index
    %c0_35 = arith.constant 0 : index
    %20 = vector.load %arg7[%c0_33, %c0_34, %c2, %c0_35] : memref<1x10x10x4xf32, #tpu.memory_space<vmem>>, vector<1x8x8x4xf32>
    %c0_36 = arith.constant 0 : index
    %c1_37 = arith.constant 1 : index
    %c0_38 = arith.constant 0 : index
    %c0_39 = arith.constant 0 : index
    %21 = vector.load %arg7[%c0_36, %c1_37, %c0_38, %c0_39] : memref<1x10x10x4xf32, #tpu.memory_space<vmem>>, vector<1x8x8x4xf32>
    %c0_40 = arith.constant 0 : index
    %c1_41 = arith.constant 1 : index
    %c1_42 = arith.constant 1 : index
    %c0_43 = arith.constant 0 : index
    %22 = vector.load %arg7[%c0_40, %c1_41, %c1_42, %c0_43] : memref<1x10x10x4xf32, #tpu.memory_space<vmem>>, vector<1x8x8x4xf32>
    %c0_44 = arith.constant 0 : index
    %c1_45 = arith.constant 1 : index
    %c2_46 = arith.constant 2 : index
    %c0_47 = arith.constant 0 : index
    %23 = vector.load %arg7[%c0_44, %c1_45, %c2_46, %c0_47] : memref<1x10x10x4xf32, #tpu.memory_space<vmem>>, vector<1x8x8x4xf32>
    %c0_48 = arith.constant 0 : index
    %c2_49 = arith.constant 2 : index
    %c0_50 = arith.constant 0 : index
    %c0_51 = arith.constant 0 : index
    %24 = vector.load %arg7[%c0_48, %c2_49, %c0_50, %c0_51] : memref<1x10x10x4xf32, #tpu.memory_space<vmem>>, vector<1x8x8x4xf32>
    %c0_52 = arith.constant 0 : index
    %c2_53 = arith.constant 2 : index
    %c1_54 = arith.constant 1 : index
    %c0_55 = arith.constant 0 : index
    %25 = vector.load %arg7[%c0_52, %c2_53, %c1_54, %c0_55] : memref<1x10x10x4xf32, #tpu.memory_space<vmem>>, vector<1x8x8x4xf32>
    %c0_56 = arith.constant 0 : index
    %c2_57 = arith.constant 2 : index
    %c2_58 = arith.constant 2 : index
    %c0_59 = arith.constant 0 : index
    %26 = vector.load %arg7[%c0_56, %c2_57, %c2_58, %c0_59] : memref<1x10x10x4xf32, #tpu.memory_space<vmem>>, vector<1x8x8x4xf32>
    %27 = tpu.concatenate %18, %19, %20, %21, %22, %23, %24, %25, %26 in 3 : vector<1x8x8x4xf32>, vector<1x8x8x4xf32>, vector<1x8x8x4xf32>, vector<1x8x8x4xf32>, vector<1x8x8x4xf32>, vector<1x8x8x4xf32>, vector<1x8x8x4xf32>, vector<1x8x8x4xf32>, vector<1x8x8x4xf32> -> vector<1x8x8x36xf32>
    %28 = vector.shape_cast %27 : vector<1x8x8x36xf32> to vector<64x36xf32>
    %29 = arith.truncf %28 : vector<64x36xf32> to vector<64x36xbf16>
    %c0_60 = arith.constant 0 : index
    %c0_61 = arith.constant 0 : index
    %30 = vector.load %arg2[%c0_60, %c0_61] : memref<36x8xbf16, #tpu.memory_space<vmem>>, vector<36x8xbf16>
    %cst_62 = arith.constant dense<0.000000e+00> : vector<64x8xf32>
    %31 = tpu.matmul %29, %30, %cst_62 {dimension_numbers = #tpu.dot_dimension_numbers<[1], [0], [0], [1], [0, 0, 1, 1], [], []>} : vector<64x36xbf16>, vector<36x8xbf16>, vector<64x8xf32> -> vector<64x8xf32>
    %c0_63 = arith.constant 0 : index
    %c0_64 = arith.constant 0 : index
    %32 = vector.load %arg3[%c0_63, %c0_64] : memref<1x8xf32, #tpu.memory_space<vmem>>, vector<1x8xf32>
    %33 = vector.broadcast %32 : vector<1x8xf32> to vector<64x8xf32>
    %34 = arith.addf %31, %33 : vector<64x8xf32>
    %cst_65 = arith.constant 0.000000e+00 : f32
    %35 = vector.broadcast %cst_65 : f32 to vector<64x8xf32>
    %36 = arith.maximumf %34, %35 : vector<64x8xf32>
    %cst_66 = arith.constant 0.000000e+00 : f32
    %37 = vector.broadcast %cst_66 : f32 to vector<1x1x10x8xf32>
    %c0_67 = arith.constant 0 : index
    %c0_68 = arith.constant 0 : index
    %c0_69 = arith.constant 0 : index
    %c0_70 = arith.constant 0 : index
    %38 = vector.load %arg8[%c0_67, %c0_68, %c0_69, %c0_70] : memref<1x10x10x8xf32, #tpu.memory_space<vmem>>, vector<1x1x10x8xf32>
    tpu.vector_store %arg8[%c0_67, %c0_68, %c0_69, %c0_70], %37 {strides = array<i32>} : memref<1x10x10x8xf32, #tpu.memory_space<vmem>>, vector<1x1x10x8xf32>,
    %cst_71 = arith.constant 0.000000e+00 : f32
    %39 = vector.broadcast %cst_71 : f32 to vector<1x1x10x8xf32>
    %c0_72 = arith.constant 0 : index
    %c9_73 = arith.constant 9 : index
    %c0_74 = arith.constant 0 : index
    %c0_75 = arith.constant 0 : index
    %40 = vector.load %arg8[%c0_72, %c9_73, %c0_74, %c0_75] : memref<1x10x10x8xf32, #tpu.memory_space<vmem>>, vector<1x1x10x8xf32>
    tpu.vector_store %arg8[%c0_72, %c9_73, %c0_74, %c0_75], %39 {strides = array<i32>} : memref<1x10x10x8xf32, #tpu.memory_space<vmem>>, vector<1x1x10x8xf32>,
    %cst_76 = arith.constant 0.000000e+00 : f32
    %41 = vector.broadcast %cst_76 : f32 to vector<1x10x1x8xf32>
    %c0_77 = arith.constant 0 : index
    %c0_78 = arith.constant 0 : index
    %c0_79 = arith.constant 0 : index
    %c0_80 = arith.constant 0 : index
    %42 = vector.load %arg8[%c0_77, %c0_78, %c0_79, %c0_80] : memref<1x10x10x8xf32, #tpu.memory_space<vmem>>, vector<1x10x1x8xf32>
    tpu.vector_store %arg8[%c0_77, %c0_78, %c0_79, %c0_80], %41 {strides = array<i32>} : memref<1x10x10x8xf32, #tpu.memory_space<vmem>>, vector<1x10x1x8xf32>,
    %cst_81 = arith.constant 0.000000e+00 : f32
    %43 = vector.broadcast %cst_81 : f32 to vector<1x10x1x8xf32>
    %c0_82 = arith.constant 0 : index
    %c0_83 = arith.constant 0 : index
    %c9_84 = arith.constant 9 : index
    %c0_85 = arith.constant 0 : index
    %44 = vector.load %arg8[%c0_82, %c0_83, %c9_84, %c0_85] : memref<1x10x10x8xf32, #tpu.memory_space<vmem>>, vector<1x10x1x8xf32>
    tpu.vector_store %arg8[%c0_82, %c0_83, %c9_84, %c0_85], %43 {strides = array<i32>} : memref<1x10x10x8xf32, #tpu.memory_space<vmem>>, vector<1x10x1x8xf32>,
    %45 = vector.shape_cast %36 : vector<64x8xf32> to vector<1x8x8x8xf32>
    %c0_86 = arith.constant 0 : index
    %c1_87 = arith.constant 1 : index
    %c1_88 = arith.constant 1 : index
    %c0_89 = arith.constant 0 : index
    %46 = vector.load %arg8[%c0_86, %c1_87, %c1_88, %c0_89] : memref<1x10x10x8xf32, #tpu.memory_space<vmem>>, vector<1x8x8x8xf32>
    tpu.vector_store %arg8[%c0_86, %c1_87, %c1_88, %c0_89], %45 {strides = array<i32>} : memref<1x10x10x8xf32, #tpu.memory_space<vmem>>, vector<1x8x8x8xf32>,
    %c0_90 = arith.constant 0 : index
    %c0_91 = arith.constant 0 : index
    %c0_92 = arith.constant 0 : index
    %c0_93 = arith.constant 0 : index
    %47 = vector.load %arg8[%c0_90, %c0_91, %c0_92, %c0_93] : memref<1x10x10x8xf32, #tpu.memory_space<vmem>>, vector<1x8x8x8xf32>
    %c0_94 = arith.constant 0 : index
    %c0_95 = arith.constant 0 : index
    %c1_96 = arith.constant 1 : index
    %c0_97 = arith.constant 0 : index
    %48 = vector.load %arg8[%c0_94, %c0_95, %c1_96, %c0_97] : memref<1x10x10x8xf32, #tpu.memory_space<vmem>>, vector<1x8x8x8xf32>
    %c0_98 = arith.constant 0 : index
    %c0_99 = arith.constant 0 : index
    %c2_100 = arith.constant 2 : index
    %c0_101 = arith.constant 0 : index
    %49 = vector.load %arg8[%c0_98, %c0_99, %c2_100, %c0_101] : memref<1x10x10x8xf32, #tpu.memory_space<vmem>>, vector<1x8x8x8xf32>
    %c0_102 = arith.constant 0 : index
    %c1_103 = arith.constant 1 : index
    %c0_104 = arith.constant 0 : index
    %c0_105 = arith.constant 0 : index
    %50 = vector.load %arg8[%c0_102, %c1_103, %c0_104, %c0_105] : memref<1x10x10x8xf32, #tpu.memory_space<vmem>>, vector<1x8x8x8xf32>
    %c0_106 = arith.constant 0 : index
    %c1_107 = arith.constant 1 : index
    %c1_108 = arith.constant 1 : index
    %c0_109 = arith.constant 0 : index
    %51 = vector.load %arg8[%c0_106, %c1_107, %c1_108, %c0_109] : memref<1x10x10x8xf32, #tpu.memory_space<vmem>>, vector<1x8x8x8xf32>
    %c0_110 = arith.constant 0 : index
    %c1_111 = arith.constant 1 : index
    %c2_112 = arith.constant 2 : index
    %c0_113 = arith.constant 0 : index
    %52 = vector.load %arg8[%c0_110, %c1_111, %c2_112, %c0_113] : memref<1x10x10x8xf32, #tpu.memory_space<vmem>>, vector<1x8x8x8xf32>
    %c0_114 = arith.constant 0 : index
    %c2_115 = arith.constant 2 : index
    %c0_116 = arith.constant 0 : index
    %c0_117 = arith.constant 0 : index
    %53 = vector.load %arg8[%c0_114, %c2_115, %c0_116, %c0_117] : memref<1x10x10x8xf32, #tpu.memory_space<vmem>>, vector<1x8x8x8xf32>
    %c0_118 = arith.constant 0 : index
    %c2_119 = arith.constant 2 : index
    %c1_120 = arith.constant 1 : index
    %c0_121 = arith.constant 0 : index
    %54 = vector.load %arg8[%c0_118, %c2_119, %c1_120, %c0_121] : memref<1x10x10x8xf32, #tpu.memory_space<vmem>>, vector<1x8x8x8xf32>
    %c0_122 = arith.constant 0 : index
    %c2_123 = arith.constant 2 : index
    %c2_124 = arith.constant 2 : index
    %c0_125 = arith.constant 0 : index
    %55 = vector.load %arg8[%c0_122, %c2_123, %c2_124, %c0_125] : memref<1x10x10x8xf32, #tpu.memory_space<vmem>>, vector<1x8x8x8xf32>
    %56 = tpu.concatenate %47, %48, %49, %50, %51, %52, %53, %54, %55 in 3 : vector<1x8x8x8xf32>, vector<1x8x8x8xf32>, vector<1x8x8x8xf32>, vector<1x8x8x8xf32>, vector<1x8x8x8xf32>, vector<1x8x8x8xf32>, vector<1x8x8x8xf32>, vector<1x8x8x8xf32>, vector<1x8x8x8xf32> -> vector<1x8x8x72xf32>
    %57 = vector.shape_cast %56 : vector<1x8x8x72xf32> to vector<64x72xf32>
    %58 = arith.truncf %57 : vector<64x72xf32> to vector<64x72xbf16>
    %c0_126 = arith.constant 0 : index
    %c0_127 = arith.constant 0 : index
    %59 = vector.load %arg4[%c0_126, %c0_127] : memref<72x8xbf16, #tpu.memory_space<vmem>>, vector<72x8xbf16>
    %cst_128 = arith.constant dense<0.000000e+00> : vector<64x8xf32>
    %60 = tpu.matmul %58, %59, %cst_128 {dimension_numbers = #tpu.dot_dimension_numbers<[1], [0], [0], [1], [0, 0, 1, 1], [], []>} : vector<64x72xbf16>, vector<72x8xbf16>, vector<64x8xf32> -> vector<64x8xf32>
    %c0_129 = arith.constant 0 : index
    %c0_130 = arith.constant 0 : index
    %61 = vector.load %arg5[%c0_129, %c0_130] : memref<1x8xf32, #tpu.memory_space<vmem>>, vector<1x8xf32>
    %62 = vector.broadcast %61 : vector<1x8xf32> to vector<64x8xf32>
    %63 = arith.addf %60, %62 : vector<64x8xf32>
    %cst_131 = arith.constant 0.000000e+00 : f32
    %64 = vector.broadcast %cst_131 : f32 to vector<64x8xf32>
    %65 = arith.maximumf %63, %64 : vector<64x8xf32>
    %66 = vector.shape_cast %65 : vector<64x8xf32> to vector<1x64x8xf32>
    %67 = vector.shape_cast %66 : vector<1x64x8xf32> to vector<64x8xf32>
    %68 = tpu.transpose %67, [1, 0] : vector<64x8xf32> -> vector<8x64xf32>
    %c0_132 = arith.constant 0 : index
    %c0_133 = arith.constant 0 : index
    %c0_134 = arith.constant 0 : index
    %69 = vector.load %arg6[%c0_132, %c0_133, %c0_134] : memref<1x8x64xf32, #tpu.memory_space<vmem>>, vector<1x8x64xf32>
    %70 = vector.shape_cast %69 : vector<1x8x64xf32> to vector<8x64xf32>
    %71 = vector.shape_cast %68 : vector<8x64xf32> to vector<1x8x64xf32>
    tpu.vector_store %arg6[%c0_132, %c0_133, %c0_134], %71 {strides = array<i32>} : memref<1x8x64xf32, #tpu.memory_space<vmem>>, vector<1x8x64xf32>,
    return
  }
  func.func @transform_0(%arg0: i32) -> (i32, i32, i32, i32, i32) {
    %c0_i32 = arith.constant 0 : i32
    %c0_i32_0 = arith.constant 0 : i32
    %c0_i32_1 = arith.constant 0 : i32
    %c0_i32_2 = arith.constant 0 : i32
    %c0_i32_3 = arith.constant 0 : i32
    return %arg0, %c0_i32, %c0_i32_0, %c0_i32_1, %c0_i32_2 : i32, i32, i32, i32, i32
  }
  func.func @transform_1(%arg0: i32) -> (i32, i32) {
    %c0_i32 = arith.constant 0 : i32
    %c0_i32_0 = arith.constant 0 : i32
    %c0_i32_1 = arith.constant 0 : i32
    return %c0_i32, %c0_i32_0 : i32, i32
  }
  func.func @transform_2(%arg0: i32) -> (i32, i32) {
    %c0_i32 = arith.constant 0 : i32
    %c0_i32_0 = arith.constant 0 : i32
    %c0_i32_1 = arith.constant 0 : i32
    return %c0_i32, %c0_i32_0 : i32, i32
  }
  func.func @transform_3(%arg0: i32) -> (i32, i32) {
    %c0_i32 = arith.constant 0 : i32
    %c0_i32_0 = arith.constant 0 : i32
    %c0_i32_1 = arith.constant 0 : i32
    return %c0_i32, %c0_i32_0 : i32, i32
  }
  func.func @transform_4(%arg0: i32) -> (i32, i32) {
    %c0_i32 = arith.constant 0 : i32
    %c0_i32_0 = arith.constant 0 : i32
    %c0_i32_1 = arith.constant 0 : i32
    return %c0_i32, %c0_i32_0 : i32, i32
  }
  func.func @transform_5(%arg0: i32) -> (i32, i32, i32) {
    %c0_i32 = arith.constant 0 : i32
    %c0_i32_0 = arith.constant 0 : i32
    %c0_i32_1 = arith.constant 0 : i32
    return %arg0, %c0_i32, %c0_i32_0 : i32, i32, i32
  }
}

</mosaic_0001>

<llo_original>
// kernel: tpu_custom_call.1
$region0: #{tpu_custom_call.1}
  #allocation0 [shape = 'u32[]', space=smem, size = 0x4, offset = 0x4, fixed_abs, tag = 'smem constant byte address 0x4 - core index']
  #allocation1 [shape = 'u32[72,128]{1,0:T(1,128)}', space=vmem, size = 0x9000, scoped, tag = 'internal scratch']
  #allocation2 [shape = 'f32[1,10,10,4]{3,2,1,0:T(8,128)}', space=vmem, size = 0x14000, scoped, tag = 'scratch operand']
  #allocation3 [shape = 'f32[1,10,10,8]{3,2,1,0:T(8,128)}', space=vmem, size = 0x14000, scoped, tag = 'scratch operand']
  %s0 = inlined_call_operand.hbm [shape: f32[2,8,2,8,8], index: 0, kind: input, shape index: {}]
  %s1 = inlined_call_operand.vmem [shape: bf16[36,8], index: 1, kind: input, shape index: {}]
  %s2 = inlined_call_operand.vmem [shape: f32[1,8], index: 2, kind: input, shape index: {}]
  %s3 = inlined_call_operand.vmem [shape: bf16[72,8], index: 3, kind: input, shape index: {}]
  %s4 = inlined_call_operand.vmem [shape: f32[1,8], index: 4, kind: input, shape index: {}]
  %s5 = inlined_call_operand.hbm [shape: f32[2,8,64], index: 5, kind: output, shape index: {}]
  %s6 = sld [smem:[#allocation0]]
  $region57: #{tpu_custom_call.1} parent=0
    _
  %s8 = ssub.s32 1, %s6
  %s9 = scalar_select 0, %s8, %s6
  $region1: #{tpu_custom_call.1} parent=0
    #allocation4 [shape = 'u8[131072]{0}', space=vmem, size = 0x20000, scoped, tag = 'input window, operand 0']
    #allocation5 [shape = 's32[2]{0}', space=sflag, size = 0x8, scoped, tag = 'scoped memory for tpu_custom_call.1']
    #allocation6 [shape = 's32[2]{0}', space=sflag, size = 0x8, scoped, tag = 'scoped memory for tpu_custom_call.1']
    #allocation7 [shape = 'u8[8192]{0}', space=vmem, size = 0x2000, scoped, tag = 'output window, operand 0']
    %10 = vsyncpa [#allocation5], 0
    %s11 = scalar_lea.sflag [#allocation5], 1
    %12 = vsyncpa %s11, 0
    %13 = vsyncpa [#allocation6], 0
    %s14 = scalar_lea.sflag [#allocation6], 1
    %15 = vsyncpa %s14, 0
    loop: start=0, step=1, limit=4
    $region2: #{tpu_custom_call.1} parent=1 // loop_pre_header
      _
    $region3: #{tpu_custom_call.1} parent=1 // loop_header
      %s17 = sphi 0, %s21
      %p18 = scmp.ge.s32.totalorder %s17, 4
      %s27 = sphi 0, %s29
      %s30 = sphi 0, %s27
      %s31 = sphi 0, %s30
      %s47 = sphi 0, %s31
      %s51 = sphi 0, %s51
      %s53 = sphi 0, %s51
      %s54 = sphi 0, %s53
      %s68 = sphi 0, %s54
      %s72 = sphi 0, %s72
      %s74 = sphi 0, %s72
      %s75 = sphi 0, %s74
      %s89 = sphi 0, %s75
      %s93 = sphi 0, %s93
      %s95 = sphi 0, %s93
      %s96 = sphi 0, %s95
      %s110 = sphi 0, %s96
      %s114 = sphi 0, %s114
      %s116 = sphi 0, %s114
      %s117 = sphi 0, %s116
      %s131 = sphi 0, %s117
      %s137 = sphi 0, %s139
      %s140 = sphi 0, %s137
      %s141 = sphi 0, %s140
      %s157 = sphi 0, %s141
    $region4: #{tpu_custom_call.1} parent=1 // loop_header_branch
      %20 = sbr.rel (%p18) target = $region8
    $region5: #{tpu_custom_call.1} parent=1 // loop_body
      %s22 = ssub.s32 %s17, 1
      %s23 = ssub.s32 %s17, 2
      %s24 = sadd.s32 %s17, 1
      %s25 = ssub.s32 %s17, %s24
      %p26 = scmp.eq.s32.totalorder %s25, 0
      %s28 = sadd.s32 %s27, 1
      %s29 = scalar_select %p26, %s27, %s28
      %p32 = pneg %p26
      %p33 = scmp.eq.s32.totalorder %s17, 1
      %p34 = por %p32, %p33
      %p35 = scmp.ne.s32.totalorder %s27, %s30
      %p36 = scmp.eq.s32.totalorder %s17, 0
      %p37 = por %p35, %p36
      %p38 = scmp.ne.s32.totalorder %s27, %s30
      %p39 = scmp.eq.s32.totalorder %s22, 1
      %p40 = por %p38, %p39
      %p41 = scmp.ne.s32.totalorder %s30, %s31
      %p42 = scmp.eq.s32.totalorder %s22, 0
      %p43 = por %p41, %p42
      %p44 = scmp.ne.s32.totalorder %s30, %s31
      %p45 = scmp.eq.s32.totalorder %s23, 1
      %p46 = por %p44, %p45
      %p48 = scmp.ne.s32.totalorder %s31, %s47
      %p49 = scmp.eq.s32.totalorder %s23, 0
      %p50 = por %p48, %p49
      %s52 = sadd.s32 %s51, 1
      %p55 = scmp.eq.s32.totalorder %s17, 1
      %p56 = scmp.ne.s32.totalorder %s51, %s53
      %p57 = scmp.eq.s32.totalorder %s17, 0
      %p58 = por %p56, %p57
      %p59 = scmp.ne.s32.totalorder %s51, %s53
      %p60 = scmp.eq.s32.totalorder %s22, 1
      %p61 = por %p59, %p60
      %p62 = scmp.ne.s32.totalorder %s53, %s54
      %p63 = scmp.eq.s32.totalorder %s22, 0
      %p64 = por %p62, %p63
      %p65 = scmp.ne.s32.totalorder %s53, %s54
      %p66 = scmp.eq.s32.totalorder %s23, 1
      %p67 = por %p65, %p66
      %p69 = scmp.ne.s32.totalorder %s54, %s68
      %p70 = scmp.eq.s32.totalorder %s23, 0
      %p71 = por %p69, %p70
      %s73 = sadd.s32 %s72, 1
      %p76 = scmp.eq.s32.totalorder %s17, 1
      %p77 = scmp.ne.s32.totalorder %s72, %s74
      %p78 = scmp.eq.s32.totalorder %s17, 0
      %p79 = por %p77, %p78
      %p80 = scmp.ne.s32.totalorder %s72, %s74
      %p81 = scmp.eq.s32.totalorder %s22, 1
      %p82 = por %p80, %p81
      %p83 = scmp.ne.s32.totalorder %s74, %s75
      %p84 = scmp.eq.s32.totalorder %s22, 0
      %p85 = por %p83, %p84
      %p86 = scmp.ne.s32.totalorder %s74, %s75
      %p87 = scmp.eq.s32.totalorder %s23, 1
      %p88 = por %p86, %p87
      %p90 = scmp.ne.s32.totalorder %s75, %s89
      %p91 = scmp.eq.s32.totalorder %s23, 0
      %p92 = por %p90, %p91
      %s94 = sadd.s32 %s93, 1
      %p97 = scmp.eq.s32.totalorder %s17, 1
      %p98 = scmp.ne.s32.totalorder %s93, %s95
      %p99 = scmp.eq.s32.totalorder %s17, 0
      %p100 = por %p98, %p99
      %p101 = scmp.ne.s32.totalorder %s93, %s95
      %p102 = scmp.eq.s32.totalorder %s22, 1
      %p103 = por %p101, %p102
      %p104 = scmp.ne.s32.totalorder %s95, %s96
      %p105 = scmp.eq.s32.totalorder %s22, 0
      %p106 = por %p104, %p105
      %p107 = scmp.ne.s32.totalorder %s95, %s96
      %p108 = scmp.eq.s32.totalorder %s23, 1
      %p109 = por %p107, %p108
      %p111 = scmp.ne.s32.totalorder %s96, %s110
      %p112 = scmp.eq.s32.totalorder %s23, 0
      %p113 = por %p111, %p112
      %s115 = sadd.s32 %s114, 1
      %p118 = scmp.eq.s32.totalorder %s17, 1
      %p119 = scmp.ne.s32.totalorder %s114, %s116
      %p120 = scmp.eq.s32.totalorder %s17, 0
      %p121 = por %p119, %p120
      %p122 = scmp.ne.s32.totalorder %s114, %s116
      %p123 = scmp.eq.s32.totalorder %s22, 1
      %p124 = por %p122, %p123
      %p125 = scmp.ne.s32.totalorder %s116, %s117
      %p126 = scmp.eq.s32.totalorder %s22, 0
      %p127 = por %p125, %p126
      %p128 = scmp.ne.s32.totalorder %s116, %s117
      %p129 = scmp.eq.s32.totalorder %s23, 1
      %p130 = por %p128, %p129
      %p132 = scmp.ne.s32.totalorder %s117, %s131
      %p133 = scmp.eq.s32.totalorder %s23, 0
      %p134 = por %p132, %p133
      %s135 = ssub.s32 %s17, %s24
      %p136 = scmp.eq.s32.totalorder %s135, 0
      %s138 = sadd.s32 %s137, 1
      %s139 = scalar_select %p136, %s137, %s138
      %p142 = pneg %p136
      %p143 = scmp.eq.s32.totalorder %s17, 1
      %p144 = por %p142, %p143
      %p145 = scmp.ne.s32.totalorder %s137, %s140
      %p146 = scmp.eq.s32.totalorder %s17, 0
      %p147 = por %p145, %p146
      %p148 = scmp.ne.s32.totalorder %s137, %s140
      %p149 = scmp.eq.s32.totalorder %s22, 1
      %p150 = por %p148, %p149
      %p151 = scmp.ne.s32.totalorder %s140, %s141
      %p152 = scmp.eq.s32.totalorder %s22, 0
      %p153 = por %p151, %p152
      %p154 = scmp.ne.s32.totalorder %s140, %s141
      %p155 = scmp.eq.s32.totalorder %s23, 1
      %p156 = por %p154, %p155
      %p158 = scmp.ne.s32.totalorder %s141, %s157
      %p159 = scmp.eq.s32.totalorder %s23, 0
      %p160 = por %p158, %p159
      %p161 = scmp.le.s32.totalorder 1, %s17
      %p162 = scmp.lt.s32.totalorder %s17, 3
      %p163 = pnand %p161, %p162
      %p164 = pneg %p163
      // Predicated region
      $region9: #{tpu_custom_call.1} parent=5 // pred_check
        _
      $region10: #{tpu_custom_call.1} parent=5 // pred_check_branch
        %166 = sbr.rel (%p163) target = $region12
      $region11: #{tpu_custom_call.1} parent=5 // pred_region
        %s167 = ssub.s32 %s17, 1
        // Predicated region
        $region13: #{tpu_custom_call.1} parent=11 // pred_check
          %p168 = pneg %p64
        $region14: #{tpu_custom_call.1} parent=11 // pred_check_branch
          %170 = sbr.rel (%p168) target = $region16
        $region15: #{tpu_custom_call.1} parent=11 // pred_region
          _
        $region16: #{tpu_custom_call.1} parent=11 // pred_fallthru
          _
        // Predicated region
        $region17: #{tpu_custom_call.1} parent=11 // pred_check
          %p171 = pneg %p85
        $region18: #{tpu_custom_call.1} parent=11 // pred_check_branch
          %173 = sbr.rel (%p171) target = $region20
        $region19: #{tpu_custom_call.1} parent=11 // pred_region
          _
        $region20: #{tpu_custom_call.1} parent=11 // pred_fallthru
          _
        // Predicated region
        $region21: #{tpu_custom_call.1} parent=11 // pred_check
          %p174 = pneg %p106
        $region22: #{tpu_custom_call.1} parent=11 // pred_check_branch
          %176 = sbr.rel (%p174) target = $region24
        $region23: #{tpu_custom_call.1} parent=11 // pred_region
          _
        $region24: #{tpu_custom_call.1} parent=11 // pred_fallthru
          _
        // Predicated region
        $region25: #{tpu_custom_call.1} parent=11 // pred_check
          %p177 = pneg %p127
        $region26: #{tpu_custom_call.1} parent=11 // pred_check_branch
          %179 = sbr.rel (%p177) target = $region28
        $region27: #{tpu_custom_call.1} parent=11 // pred_region
          _
        $region28: #{tpu_custom_call.1} parent=11 // pred_fallthru
          _
      $region12: #{tpu_custom_call.1} parent=5 // pred_fallthru
        _
      %p180 = scmp.lt.s32.totalorder %s17, 2
      // Predicated region
      $region29: #{tpu_custom_call.1} parent=5 // pred_check
        %p181 = pneg %p180
      $region30: #{tpu_custom_call.1} parent=5 // pred_check_branch
        %183 = sbr.rel (%p181) target = $region32
      $region31: #{tpu_custom_call.1} parent=5 // pred_region
        // Predicated region
        $region33: #{tpu_custom_call.1} parent=31 // pred_check
          %p184 = pneg %p37
        $region34: #{tpu_custom_call.1} parent=31 // pred_check_branch
          %186 = sbr.rel (%p184) target = $region36
        $region35: #{tpu_custom_call.1} parent=31 // pred_region
          %s187 = sand.u32 %s27, 1
          %s188 = scalar_lea.sflag [#allocation5], %s187
          %s189 = sand.u32 %s27, 1
          %s190 = smul.addr %s189, 128
          %s191 = scalar_lea.vmem [#allocation4], %s190
          %193 = vsyncadd %s188, 0
          %s194 = smul.addr %s17, 16
          %s195 = smul.addr %s194, 8
          %s196 = scalar_lea.hbm %s0, %s195
          %s197 = sshll.u32 %s196, 4
          %s198 = int_to_ptr.hbm [resolvable:$true] %s197
          %s199 = sshll.u32 %s191, 4
          %s200 = int_to_ptr.vmem [resolvable:$true] %s199
          %205 = dma.hbm_to_vmem [thread:$0]  %s198, 2048, %s200, %s188, 128, 128, 8
        $region36: #{tpu_custom_call.1} parent=31 // pred_fallthru
          _
      $region32: #{tpu_custom_call.1} parent=5 // pred_fallthru
        _
      %p206 = scmp.le.s32.totalorder 1, %s17
      %p207 = scmp.lt.s32.totalorder %s17, 3
      %p208 = pnand %p206, %p207
      %p209 = pneg %p208
      // Predicated region
      $region37: #{tpu_custom_call.1} parent=5 // pred_check
        _
      $region38: #{tpu_custom_call.1} parent=5 // pred_check_branch
        %211 = sbr.rel (%p208) target = $region40
      $region39: #{tpu_custom_call.1} parent=5 // pred_region
        %s212 = ssub.s32 %s17, 1
        %s213 = sand.u32 %s30, 1
        %s214 = scalar_lea.sflag [#allocation5], %s213
        %s215 = sand.u32 %s30, 1
        %s216 = smul.addr %s215, 128
        %s217 = scalar_lea.vmem [#allocation4], %s216
        // Predicated region
        $region41: #{tpu_custom_call.1} parent=39 // pred_check
          %p218 = pneg %p43
        $region42: #{tpu_custom_call.1} parent=39 // pred_check_branch
          %220 = sbr.rel (%p218) target = $region44
        $region43: #{tpu_custom_call.1} parent=39 // pred_region
          %222 = dma.done %s214, 2048
        $region44: #{tpu_custom_call.1} parent=39 // pred_fallthru
          _
        %s223 = sand.u32 %s30, 1
        %s224 = scalar_lea.sflag [#allocation5], %s223
        %s225 = sand.u32 %s30, 1
        %s226 = smul.addr %s225, 128
        %s227 = scalar_lea.vmem [#allocation4], %s226
        %p228 = pneg %p43
        %p229 = pneg %p40
        %p230 = pneg %p64
        %p231 = pneg %p61
        %p232 = pneg %p85
        %p233 = pneg %p82
        %p234 = pneg %p106
        %p235 = pneg %p103
        %p236 = pneg %p127
        %p237 = pneg %p124
        %p238 = pneg %p153
        %p239 = pneg %p150
        %s240 = sand.u32 %s140, 1
        %s241 = scalar_lea.sflag [#allocation6], %s240
        %s242 = sand.u32 %s140, 1
        %s243 = smul.addr %s242, 8
        %s244 = scalar_lea.vmem [#allocation7], %s243
        %v246 = vld [vmem:[%s217] sm:$0xff]
        %v247 = vld [vmem:[%s217 + $0x8] sm:$0xff]
        %v248 = vld [vmem:[%s217 + $0x10] sm:$0xff]
        %v249 = vld [vmem:[%s217 + $0x18] sm:$0xff]
        %v250 = vld [vmem:[%s217 + $0x20] sm:$0xff]
        %v251 = vld [vmem:[%s217 + $0x28] sm:$0xff]
        %v252 = vld [vmem:[%s217 + $0x30] sm:$0xff]
        %v253 = vld [vmem:[%s217 + $0x38] sm:$0xff]
        %v254 = vld [vmem:[%s217 + $0x40] sm:$0xff]
        %v255 = vld [vmem:[%s217 + $0x48] sm:$0xff]
        %v256 = vld [vmem:[%s217 + $0x50] sm:$0xff]
        %v257 = vld [vmem:[%s217 + $0x58] sm:$0xff]
        %v258 = vld [vmem:[%s217 + $0x60] sm:$0xff]
        %v259 = vld [vmem:[%s217 + $0x68] sm:$0xff]
        %v260 = vld [vmem:[%s217 + $0x70] sm:$0xff]
        %v261 = vld [vmem:[%s217 + $0x78] sm:$0xff]
        %v262 = vmax.f32 %v246, %v247
        %v263 = vmax.f32 %v248, %v249
        %v264 = vmax.f32 %v250, %v251
        %v265 = vmax.f32 %v252, %v253
        %v266 = vmax.f32 %v254, %v255
        %v267 = vmax.f32 %v256, %v257
        %v268 = vmax.f32 %v258, %v259
        %v269 = vmax.f32 %v260, %v261
        %278 = vrot.lane.b32.xlu0 %v262, 124
        %v279 = vpop.permute.xlu0 %278
        %280 = vrot.lane.b32.xlu0 %v263, 124
        %v281 = vpop.permute.xlu0 %280
        %282 = vrot.lane.b32.xlu0 %v264, 124
        %v283 = vpop.permute.xlu0 %282
        %284 = vrot.lane.b32.xlu0 %v265, 124
        %v285 = vpop.permute.xlu0 %284
        %286 = vrot.lane.b32.xlu0 %v266, 124
        %v287 = vpop.permute.xlu0 %286
        %288 = vrot.lane.b32.xlu0 %v267, 124
        %v289 = vpop.permute.xlu0 %288
        %290 = vrot.lane.b32.xlu0 %v268, 124
        %v291 = vpop.permute.xlu0 %290
        %292 = vrot.lane.b32.xlu0 %v269, 124
        %v293 = vpop.permute.xlu0 %292
        %v302 = vmax.f32 %v262, %v279
        %v303 = vmax.f32 %v263, %v281
        %v304 = vmax.f32 %v264, %v283
        %v305 = vmax.f32 %v265, %v285
        %v306 = vmax.f32 %v266, %v287
        %v307 = vmax.f32 %v267, %v289
        %v308 = vmax.f32 %v268, %v291
        %v309 = vmax.f32 %v269, %v293
        %vm310 = vcmask 31744
        %311 = vst.msk [vmem:[#allocation2] sm:$0xff] %vm310, 0.0
        %vm312 = vcmask 25600
        %313 = vst.msk [vmem:[#allocation2 + $0x8] sm:$0x3] %vm312, 0.0
        %s314 = scalar_lea.vmem [#allocation2], 144
        %315 = vst.msk [vmem:[%s314] sm:$0xff] %vm310, 0.0
        %316 = vst.msk [vmem:[%s314 + $0x8] sm:$0x3] %vm312, 0.0
        %vm317 = vcmask 24576
        %318 = vst.msk [vmem:[#allocation2] sm:$0x1] %vm317, 0.0
        %319 = vst.msk [vmem:[#allocation2 + $0x10] sm:$0x1] %vm317, 0.0
        %320 = vst.msk [vmem:[#allocation2 + $0x20] sm:$0x1] %vm317, 0.0
        %321 = vst.msk [vmem:[#allocation2 + $0x30] sm:$0x1] %vm317, 0.0
        %322 = vst.msk [vmem:[#allocation2 + $0x40] sm:$0x1] %vm317, 0.0
        %323 = vst.msk [vmem:[#allocation2 + $0x50] sm:$0x1] %vm317, 0.0
        %324 = vst.msk [vmem:[#allocation2 + $0x60] sm:$0x1] %vm317, 0.0
        %325 = vst.msk [vmem:[#allocation2 + $0x70] sm:$0x1] %vm317, 0.0
        %326 = vst.msk [vmem:[#allocation2 + $0x80] sm:$0x1] %vm317, 0.0
        %327 = vst.msk [vmem:[#allocation2 + $0x90] sm:$0x1] %vm317, 0.0
        %328 = vst.msk [vmem:[#allocation2 + $0x9] sm:$0x1] %vm317, 0.0
        %329 = vst.msk [vmem:[#allocation2 + $0x19] sm:$0x1] %vm317, 0.0
        %330 = vst.msk [vmem:[#allocation2 + $0x29] sm:$0x1] %vm317, 0.0
        %331 = vst.msk [vmem:[#allocation2 + $0x39] sm:$0x1] %vm317, 0.0
        %332 = vst.msk [vmem:[#allocation2 + $0x49] sm:$0x1] %vm317, 0.0
        %333 = vst.msk [vmem:[#allocation2 + $0x59] sm:$0x1] %vm317, 0.0
        %334 = vst.msk [vmem:[#allocation2 + $0x69] sm:$0x1] %vm317, 0.0
        %335 = vst.msk [vmem:[#allocation2 + $0x79] sm:$0x1] %vm317, 0.0
        %336 = vst.msk [vmem:[#allocation2 + $0x89] sm:$0x1] %vm317, 0.0
        %337 = vst.msk [vmem:[#allocation2 + $0x99] sm:$0x1] %vm317, 0.0
        %s338 = scalar_lea.vmem [#allocation2], 16
        %339 = vst.msk [vmem:[%s338 + $0x1] sm:$0xff] %vm310, %v302
        %340 = vst.msk [vmem:[%s338 + $0x11] sm:$0xff] %vm310, %v303
        %341 = vst.msk [vmem:[%s338 + $0x21] sm:$0xff] %vm310, %v304
        %342 = vst.msk [vmem:[%s338 + $0x31] sm:$0xff] %vm310, %v305
        %343 = vst.msk [vmem:[%s338 + $0x41] sm:$0xff] %vm310, %v306
        %344 = vst.msk [vmem:[%s338 + $0x51] sm:$0xff] %vm310, %v307
        %345 = vst.msk [vmem:[%s338 + $0x61] sm:$0xff] %vm310, %v308
        %346 = vst.msk [vmem:[%s338 + $0x71] sm:$0xff] %vm310, %v309
        %v347 = vld [vmem:[#allocation2] sm:$0xff]
        %v348 = vld [vmem:[#allocation2 + $0x10] sm:$0xff]
        %v349 = vld [vmem:[#allocation2 + $0x20] sm:$0xff]
        %v350 = vld [vmem:[#allocation2 + $0x30] sm:$0xff]
        %v351 = vld [vmem:[#allocation2 + $0x40] sm:$0xff]
        %v352 = vld [vmem:[#allocation2 + $0x50] sm:$0xff]
        %v353 = vld [vmem:[#allocation2 + $0x60] sm:$0xff]
        %v354 = vld [vmem:[#allocation2 + $0x70] sm:$0xff]
        %v355 = vld [vmem:[#allocation2 + $0x1] sm:$0xff]
        %v356 = vld [vmem:[#allocation2 + $0x11] sm:$0xff]
        %v357 = vld [vmem:[#allocation2 + $0x21] sm:$0xff]
        %v358 = vld [vmem:[#allocation2 + $0x31] sm:$0xff]
        %v359 = vld [vmem:[#allocation2 + $0x41] sm:$0xff]
        %v360 = vld [vmem:[#allocation2 + $0x51] sm:$0xff]
        %v361 = vld [vmem:[#allocation2 + $0x61] sm:$0xff]
        %v362 = vld [vmem:[#allocation2 + $0x71] sm:$0xff]
        %v363 = vld [vmem:[#allocation2 + $0x2] sm:$0xff]
        %v364 = vld [vmem:[#allocation2 + $0x12] sm:$0xff]
        %v365 = vld [vmem:[#allocation2 + $0x22] sm:$0xff]
        %v366 = vld [vmem:[#allocation2 + $0x32] sm:$0xff]
        %v367 = vld [vmem:[#allocation2 + $0x42] sm:$0xff]
        %v368 = vld [vmem:[#allocation2 + $0x52] sm:$0xff]
        %v369 = vld [vmem:[#allocation2 + $0x62] sm:$0xff]
        %v370 = vld [vmem:[#allocation2 + $0x72] sm:$0xff]
        %v371 = vld [vmem:[%s338] sm:$0xff]
        %v372 = vld [vmem:[%s338 + $0x10] sm:$0xff]
        %v373 = vld [vmem:[%s338 + $0x20] sm:$0xff]
        %v374 = vld [vmem:[%s338 + $0x30] sm:$0xff]
        %v375 = vld [vmem:[%s338 + $0x40] sm:$0xff]
        %v376 = vld [vmem:[%s338 + $0x50] sm:$0xff]
        %v377 = vld [vmem:[%s338 + $0x60] sm:$0xff]
        %v378 = vld [vmem:[%s338 + $0x70] sm:$0xff]
        %v379 = vld [vmem:[%s338 + $0x1] sm:$0xff]
        %v380 = vld [vmem:[%s338 + $0x11] sm:$0xff]
        %v381 = vld [vmem:[%s338 + $0x21] sm:$0xff]
        %v382 = vld [vmem:[%s338 + $0x31] sm:$0xff]
        %v383 = vld [vmem:[%s338 + $0x41] sm:$0xff]
        %v384 = vld [vmem:[%s338 + $0x51] sm:$0xff]
        %v385 = vld [vmem:[%s338 + $0x61] sm:$0xff]
        %v386 = vld [vmem:[%s338 + $0x71] sm:$0xff]
        %v387 = vld [vmem:[%s338 + $0x2] sm:$0xff]
        %v388 = vld [vmem:[%s338 + $0x12] sm:$0xff]
        %v389 = vld [vmem:[%s338 + $0x22] sm:$0xff]
        %v390 = vld [vmem:[%s338 + $0x32] sm:$0xff]
        %v391 = vld [vmem:[%s338 + $0x42] sm:$0xff]
        %v392 = vld [vmem:[%s338 + $0x52] sm:$0xff]
        %v393 = vld [vmem:[%s338 + $0x62] sm:$0xff]
        %v394 = vld [vmem:[%s338 + $0x72] sm:$0xff]
        %s395 = scalar_lea.vmem [#allocation2], 32
        %v396 = vld [vmem:[%s395] sm:$0xff]
        %v397 = vld [vmem:[%s395 + $0x10] sm:$0xff]
        %v398 = vld [vmem:[%s395 + $0x20] sm:$0xff]
        %v399 = vld [vmem:[%s395 + $0x30] sm:$0xff]
        %v400 = vld [vmem:[%s395 + $0x40] sm:$0xff]
        %v401 = vld [vmem:[%s395 + $0x50] sm:$0xff]
        %v402 = vld [vmem:[%s395 + $0x60] sm:$0xff]
        %v403 = vld [vmem:[%s395 + $0x70] sm:$0xff]
        %v404 = vld [vmem:[%s395 + $0x1] sm:$0xff]
        %v405 = vld [vmem:[%s395 + $0x11] sm:$0xff]
        %v406 = vld [vmem:[%s395 + $0x21] sm:$0xff]
        %v407 = vld [vmem:[%s395 + $0x31] sm:$0xff]
        %v408 = vld [vmem:[%s395 + $0x41] sm:$0xff]
        %v409 = vld [vmem:[%s395 + $0x51] sm:$0xff]
        %v410 = vld [vmem:[%s395 + $0x61] sm:$0xff]
        %v411 = vld [vmem:[%s395 + $0x71] sm:$0xff]
        %v412 = vld [vmem:[%s395 + $0x2] sm:$0xff]
        %v413 = vld [vmem:[%s395 + $0x12] sm:$0xff]
        %v414 = vld [vmem:[%s395 + $0x22] sm:$0xff]
        %v415 = vld [vmem:[%s395 + $0x32] sm:$0xff]
        %v416 = vld [vmem:[%s395 + $0x42] sm:$0xff]
        %v417 = vld [vmem:[%s395 + $0x52] sm:$0xff]
        %v418 = vld [vmem:[%s395 + $0x62] sm:$0xff]
        %v419 = vld [vmem:[%s395 + $0x72] sm:$0xff]
        %428 = vrot.lane.b32.xlu0 %v355, 4
        %v429 = vpop.permute.xlu0 %428
        %430 = vrot.lane.b32.xlu0 %v356, 4
        %v431 = vpop.permute.xlu0 %430
        %432 = vrot.lane.b32.xlu0 %v357, 4
        %v433 = vpop.permute.xlu0 %432
        %434 = vrot.lane.b32.xlu0 %v358, 4
        %v435 = vpop.permute.xlu0 %434
        %436 = vrot.lane.b32.xlu0 %v359, 4
        %v437 = vpop.permute.xlu0 %436
        %438 = vrot.lane.b32.xlu0 %v360, 4
        %v439 = vpop.permute.xlu0 %438
        %440 = vrot.lane.b32.xlu0 %v361, 4
        %v441 = vpop.permute.xlu0 %440
        %442 = vrot.lane.b32.xlu0 %v362, 4
        %v443 = vpop.permute.xlu0 %442
        %460 = vrot.lane.b32.xlu0 %v363, 8
        %v461 = vpop.permute.xlu0 %460
        %462 = vrot.lane.b32.xlu0 %v364, 8
        %v463 = vpop.permute.xlu0 %462
        %464 = vrot.lane.b32.xlu0 %v365, 8
        %v465 = vpop.permute.xlu0 %464
        %466 = vrot.lane.b32.xlu0 %v366, 8
        %v467 = vpop.permute.xlu0 %466
        %468 = vrot.lane.b32.xlu0 %v367, 8
        %v469 = vpop.permute.xlu0 %468
        %470 = vrot.lane.b32.xlu0 %v368, 8
        %v471 = vpop.permute.xlu0 %470
        %472 = vrot.lane.b32.xlu0 %v369, 8
        %v473 = vpop.permute.xlu0 %472
        %474 = vrot.lane.b32.xlu0 %v370, 8
        %v475 = vpop.permute.xlu0 %474
        %492 = vrot.lane.b32.xlu0 %v371, 12
        %v493 = vpop.permute.xlu0 %492
        %494 = vrot.lane.b32.xlu0 %v372, 12
        %v495 = vpop.permute.xlu0 %494
        %496 = vrot.lane.b32.xlu0 %v373, 12
        %v497 = vpop.permute.xlu0 %496
        %498 = vrot.lane.b32.xlu0 %v374, 12
        %v499 = vpop.permute.xlu0 %498
        %500 = vrot.lane.b32.xlu0 %v375, 12
        %v501 = vpop.permute.xlu0 %500
        %502 = vrot.lane.b32.xlu0 %v376, 12
        %v503 = vpop.permute.xlu0 %502
        %504 = vrot.lane.b32.xlu0 %v377, 12
        %v505 = vpop.permute.xlu0 %504
        %506 = vrot.lane.b32.xlu0 %v378, 12
        %v507 = vpop.permute.xlu0 %506
        %524 = vrot.lane.b32.xlu0 %v379, 16
        %v525 = vpop.permute.xlu0 %524
        %526 = vrot.lane.b32.xlu0 %v380, 16
        %v527 = vpop.permute.xlu0 %526
        %528 = vrot.lane.b32.xlu0 %v381, 16
        %v529 = vpop.permute.xlu0 %528
        %530 = vrot.lane.b32.xlu0 %v382, 16
        %v531 = vpop.permute.xlu0 %530
        %532 = vrot.lane.b32.xlu0 %v383, 16
        %v533 = vpop.permute.xlu0 %532
        %534 = vrot.lane.b32.xlu0 %v384, 16
        %v535 = vpop.permute.xlu0 %534
        %536 = vrot.lane.b32.xlu0 %v385, 16
        %v537 = vpop.permute.xlu0 %536
        %538 = vrot.lane.b32.xlu0 %v386, 16
        %v539 = vpop.permute.xlu0 %538
        %556 = vrot.lane.b32.xlu0 %v387, 20
        %v557 = vpop.permute.xlu0 %556
        %558 = vrot.lane.b32.xlu0 %v388, 20
        %v559 = vpop.permute.xlu0 %558
        %560 = vrot.lane.b32.xlu0 %v389, 20
        %v561 = vpop.permute.xlu0 %560
        %562 = vrot.lane.b32.xlu0 %v390, 20
        %v563 = vpop.permute.xlu0 %562
        %564 = vrot.lane.b32.xlu0 %v391, 20
        %v565 = vpop.permute.xlu0 %564
        %566 = vrot.lane.b32.xlu0 %v392, 20
        %v567 = vpop.permute.xlu0 %566
        %568 = vrot.lane.b32.xlu0 %v393, 20
        %v569 = vpop.permute.xlu0 %568
        %570 = vrot.lane.b32.xlu0 %v394, 20
        %v571 = vpop.permute.xlu0 %570
        %588 = vrot.lane.b32.xlu0 %v396, 24
        %v589 = vpop.permute.xlu0 %588
        %590 = vrot.lane.b32.xlu0 %v397, 24
        %v591 = vpop.permute.xlu0 %590
        %592 = vrot.lane.b32.xlu0 %v398, 24
        %v593 = vpop.permute.xlu0 %592
        %594 = vrot.lane.b32.xlu0 %v399, 24
        %v595 = vpop.permute.xlu0 %594
        %596 = vrot.lane.b32.xlu0 %v400, 24
        %v597 = vpop.permute.xlu0 %596
        %598 = vrot.lane.b32.xlu0 %v401, 24
        %v599 = vpop.permute.xlu0 %598
        %600 = vrot.lane.b32.xlu0 %v402, 24
        %v601 = vpop.permute.xlu0 %600
        %602 = vrot.lane.b32.xlu0 %v403, 24
        %v603 = vpop.permute.xlu0 %602
        %620 = vrot.lane.b32.xlu0 %v404, 28
        %v621 = vpop.permute.xlu0 %620
        %622 = vrot.lane.b32.xlu0 %v405, 28
        %v623 = vpop.permute.xlu0 %622
        %624 = vrot.lane.b32.xlu0 %v406, 28
        %v625 = vpop.permute.xlu0 %624
        %626 = vrot.lane.b32.xlu0 %v407, 28
        %v627 = vpop.permute.xlu0 %626
        %628 = vrot.lane.b32.xlu0 %v408, 28
        %v629 = vpop.permute.xlu0 %628
        %630 = vrot.lane.b32.xlu0 %v409, 28
        %v631 = vpop.permute.xlu0 %630
        %632 = vrot.lane.b32.xlu0 %v410, 28
        %v633 = vpop.permute.xlu0 %632
        %634 = vrot.lane.b32.xlu0 %v411, 28
        %v635 = vpop.permute.xlu0 %634
        %652 = vrot.lane.b32.xlu0 %v412, 32
        %v653 = vpop.permute.xlu0 %652
        %654 = vrot.lane.b32.xlu0 %v413, 32
        %v655 = vpop.permute.xlu0 %654
        %656 = vrot.lane.b32.xlu0 %v414, 32
        %v657 = vpop.permute.xlu0 %656
        %658 = vrot.lane.b32.xlu0 %v415, 32
        %v659 = vpop.permute.xlu0 %658
        %660 = vrot.lane.b32.xlu0 %v416, 32
        %v661 = vpop.permute.xlu0 %660
        %662 = vrot.lane.b32.xlu0 %v417, 32
        %v663 = vpop.permute.xlu0 %662
        %664 = vrot.lane.b32.xlu0 %v418, 32
        %v665 = vpop.permute.xlu0 %664
        %666 = vrot.lane.b32.xlu0 %v419, 32
        %v667 = vpop.permute.xlu0 %666
        %v676 = vsel %vm310, %v347, %v429
        %v677 = vsel %vm310, %v348, %v431
        %v678 = vsel %vm310, %v349, %v433
        %v679 = vsel %vm310, %v350, %v435
        %v680 = vsel %vm310, %v351, %v437
        %v681 = vsel %vm310, %v352, %v439
        %v682 = vsel %vm310, %v353, %v441
        %v683 = vsel %vm310, %v354, %v443
        %vm684 = vcmask 64512
        %v685 = vsel %vm684, %v676, %v461
        %v686 = vsel %vm684, %v677, %v463
        %v687 = vsel %vm684, %v678, %v465
        %v688 = vsel %vm684, %v679, %v467
        %v689 = vsel %vm684, %v680, %v469
        %v690 = vsel %vm684, %v681, %v471
        %v691 = vsel %vm684, %v682, %v473
        %v692 = vsel %vm684, %v683, %v475
        %vm693 = vcmask 97280
        %v694 = vsel %vm693, %v685, %v493
        %v695 = vsel %vm693, %v686, %v495
        %v696 = vsel %vm693, %v687, %v497
        %v697 = vsel %vm693, %v688, %v499
        %v698 = vsel %vm693, %v689, %v501
        %v699 = vsel %vm693, %v690, %v503
        %v700 = vsel %vm693, %v691, %v505
        %v701 = vsel %vm693, %v692, %v507
        %vm702 = vcmask 130048
        %v703 = vsel %vm702, %v694, %v525
        %v704 = vsel %vm702, %v695, %v527
        %v705 = vsel %vm702, %v696, %v529
        %v706 = vsel %vm702, %v697, %v531
        %v707 = vsel %vm702, %v698, %v533
        %v708 = vsel %vm702, %v699, %v535
        %v709 = vsel %vm702, %v700, %v537
        %v710 = vsel %vm702, %v701, %v539
        %vm711 = vcmask 162816
        %v712 = vsel %vm711, %v703, %v557
        %v713 = vsel %vm711, %v704, %v559
        %v714 = vsel %vm711, %v705, %v561
        %v715 = vsel %vm711, %v706, %v563
        %v716 = vsel %vm711, %v707, %v565
        %v717 = vsel %vm711, %v708, %v567
        %v718 = vsel %vm711, %v709, %v569
        %v719 = vsel %vm711, %v710, %v571
        %vm720 = vcmask 195584
        %v721 = vsel %vm720, %v712, %v589
        %v722 = vsel %vm720, %v713, %v591
        %v723 = vsel %vm720, %v714, %v593
        %v724 = vsel %vm720, %v715, %v595
        %v725 = vsel %vm720, %v716, %v597
        %v726 = vsel %vm720, %v717, %v599
        %v727 = vsel %vm720, %v718, %v601
        %v728 = vsel %vm720, %v719, %v603
        %vm729 = vcmask 228352
        %v730 = vsel %vm729, %v721, %v621
        %v731 = vsel %vm729, %v722, %v623
        %v732 = vsel %vm729, %v723, %v625
        %v733 = vsel %vm729, %v724, %v627
        %v734 = vsel %vm729, %v725, %v629
        %v735 = vsel %vm729, %v726, %v631
        %v736 = vsel %vm729, %v727, %v633
        %v737 = vsel %vm729, %v728, %v635
        %vm738 = vcmask 261120
        %v739 = vsel %vm738, %v730, %v653
        %v740 = vsel %vm738, %v731, %v655
        %v741 = vsel %vm738, %v732, %v657
        %v742 = vsel %vm738, %v733, %v659
        %v743 = vsel %vm738, %v734, %v661
        %v744 = vsel %vm738, %v735, %v663
        %v745 = vsel %vm738, %v736, %v665
        %v746 = vsel %vm738, %v737, %v667
        %v747 = vpack.c.bf16 %v740, %v739
        %v748 = vpack.c.bf16 %v742, %v741
        %v749 = vpack.c.bf16 %v744, %v743
        %v750 = vpack.c.bf16 %v746, %v745
        %v751 = vld [vmem:[%s1] sm:$0xf]
        %v752 = vld [vmem:[%s1 + $0x4] sm:$0xf]
        %v753 = vld [vmem:[%s1 + $0x8] sm:$0xf]
        %v754 = vld [vmem:[%s1 + $0xc] sm:$0xf]
        %v755 = vld [vmem:[%s1 + $0x10] sm:$0x3]
        %v756 = vld [vmem:[%s2] sm:$0x1]
        %v758 = vperm.slane %v756, 0
        %v765 = vunpack.c.l.b16 %v751
        %v766 = vunpack.c.l.b16 %v752
        %v767 = vunpack.c.l.b16 %v753
        %v768 = vunpack.c.l.b16 %v754
        %v769 = vunpack.c.l.b16 %v755
        %v770 = vpack.c.b16 %v766, %v765
        %v771 = vpack.c.b16 %v768, %v767
        %v772 = vpack.c.b16 %v769, %v769
        %vm775 = vcmask 293888
        %v777 = vsel %vm775, %v747, 0
        %v780 = vsel %vm775, %v748, 0
        %v783 = vsel %vm775, %v749, 0
        %v786 = vsel %vm775, %v750, 0
        %vm788 = vcmask 1041408
        %v790 = vsel %vm788, %v772, 0
        %792 = vmatpush.bf16.msra.mxu0 0
        %793 = vmatpush.bf16.msra.mxu0 0
        %794 = vmatpush.bf16.msra.mxu0 0
        %795 = vmatpush.bf16.msra.mxu0 0
        %796 = vmatpush.bf16.msra.mxu0 0
        %797 = vmatpush.bf16.msra.mxu0 %v790
        %798 = vmatpush.bf16.msra.mxu0 %v771
        %799 = vmatpush.bf16.msra.mxu0 %v770
        %800 = vmatmul.bf16.gmra.mxu0 %v777
        %v801 = vpop.f32.mrf.mxu0
        %v802 = vadd.f32 %v758, %v801
        %v803 = vpop.f32.mrf.mxu0
        %v804 = vadd.f32 %v758, %v803
        %805 = vmatmul.bf16.gmra.mxu0 %v780
        %v806 = vpop.f32.mrf.mxu0
        %v807 = vadd.f32 %v758, %v806
        %v808 = vpop.f32.mrf.mxu0
        %v809 = vadd.f32 %v758, %v808
        %810 = vmatmul.bf16.gmra.mxu0 %v783
        %v811 = vpop.f32.mrf.mxu0
        %v812 = vadd.f32 %v758, %v811
        %v813 = vpop.f32.mrf.mxu0
        %v814 = vadd.f32 %v758, %v813
        %815 = vmatmul.bf16.gmra.mxu0 %v786
        %v816 = vpop.f32.mrf.mxu0
        %v817 = vadd.f32 %v758, %v816
        %v818 = vpop.f32.mrf.mxu0
        %v819 = vadd.f32 %v758, %v818
        %820 = vdwg.mxu0
        %v821 = vmax.f32 %v802, 0.0
        %v822 = vmax.f32 %v804, 0.0
        %v823 = vmax.f32 %v807, 0.0
        %v824 = vmax.f32 %v809, 0.0
        %v825 = vmax.f32 %v812, 0.0
        %v826 = vmax.f32 %v814, 0.0
        %v827 = vmax.f32 %v817, 0.0
        %v828 = vmax.f32 %v819, 0.0
        %829 = vst.msk [vmem:[#allocation3] sm:$0xff] %vm684, 0.0
        %vm830 = vcmask 58368
        %831 = vst.msk [vmem:[#allocation3 + $0x8] sm:$0x3] %vm830, 0.0
        %s832 = scalar_lea.vmem [#allocation3], 144
        %833 = vst.msk [vmem:[%s832] sm:$0xff] %vm684, 0.0
        %834 = vst.msk [vmem:[%s832 + $0x8] sm:$0x3] %vm830, 0.0
        %vm835 = vcmask 57344
        %836 = vst.msk [vmem:[#allocation3] sm:$0x1] %vm835, 0.0
        %837 = vst.msk [vmem:[#allocation3 + $0x10] sm:$0x1] %vm835, 0.0
        %838 = vst.msk [vmem:[#allocation3 + $0x20] sm:$0x1] %vm835, 0.0
        %839 = vst.msk [vmem:[#allocation3 + $0x30] sm:$0x1] %vm835, 0.0
        %840 = vst.msk [vmem:[#allocation3 + $0x40] sm:$0x1] %vm835, 0.0
        %841 = vst.msk [vmem:[#allocation3 + $0x50] sm:$0x1] %vm835, 0.0
        %842 = vst.msk [vmem:[#allocation3 + $0x60] sm:$0x1] %vm835, 0.0
        %843 = vst.msk [vmem:[#allocation3 + $0x70] sm:$0x1] %vm835, 0.0
        %844 = vst.msk [vmem:[#allocation3 + $0x80] sm:$0x1] %vm835, 0.0
        %845 = vst.msk [vmem:[#allocation3 + $0x90] sm:$0x1] %vm835, 0.0
        %846 = vst.msk [vmem:[#allocation3 + $0x9] sm:$0x1] %vm835, 0.0
        %847 = vst.msk [vmem:[#allocation3 + $0x19] sm:$0x1] %vm835, 0.0
        %848 = vst.msk [vmem:[#allocation3 + $0x29] sm:$0x1] %vm835, 0.0
        %849 = vst.msk [vmem:[#allocation3 + $0x39] sm:$0x1] %vm835, 0.0
        %850 = vst.msk [vmem:[#allocation3 + $0x49] sm:$0x1] %vm835, 0.0
        %851 = vst.msk [vmem:[#allocation3 + $0x59] sm:$0x1] %vm835, 0.0
        %852 = vst.msk [vmem:[#allocation3 + $0x69] sm:$0x1] %vm835, 0.0
        %853 = vst.msk [vmem:[#allocation3 + $0x79] sm:$0x1] %vm835, 0.0
        %854 = vst.msk [vmem:[#allocation3 + $0x89] sm:$0x1] %vm835, 0.0
        %855 = vst.msk [vmem:[#allocation3 + $0x99] sm:$0x1] %vm835, 0.0
        %s856 = scalar_lea.vmem [#allocation3], 16
        %857 = vst.msk [vmem:[%s856 + $0x1] sm:$0xff] %vm684, %v821
        %858 = vst.msk [vmem:[%s856 + $0x11] sm:$0xff] %vm684, %v822
        %859 = vst.msk [vmem:[%s856 + $0x21] sm:$0xff] %vm684, %v823
        %860 = vst.msk [vmem:[%s856 + $0x31] sm:$0xff] %vm684, %v824
        %861 = vst.msk [vmem:[%s856 + $0x41] sm:$0xff] %vm684, %v825
        %862 = vst.msk [vmem:[%s856 + $0x51] sm:$0xff] %vm684, %v826
        %863 = vst.msk [vmem:[%s856 + $0x61] sm:$0xff] %vm684, %v827
        %864 = vst.msk [vmem:[%s856 + $0x71] sm:$0xff] %vm684, %v828
        %v865 = vld [vmem:[#allocation3] sm:$0xff]
        %v866 = vld [vmem:[#allocation3 + $0x10] sm:$0xff]
        %v867 = vld [vmem:[#allocation3 + $0x20] sm:$0xff]
        %v868 = vld [vmem:[#allocation3 + $0x30] sm:$0xff]
        %v869 = vld [vmem:[#allocation3 + $0x40] sm:$0xff]
        %v870 = vld [vmem:[#allocation3 + $0x50] sm:$0xff]
        %v871 = vld [vmem:[#allocation3 + $0x60] sm:$0xff]
        %v872 = vld [vmem:[#allocation3 + $0x70] sm:$0xff]
        %v873 = vld [vmem:[#allocation3 + $0x1] sm:$0xff]
        %v874 = vld [vmem:[#allocation3 + $0x11] sm:$0xff]
        %v875 = vld [vmem:[#allocation3 + $0x21] sm:$0xff]
        %v876 = vld [vmem:[#allocation3 + $0x31] sm:$0xff]
        %v877 = vld [vmem:[#allocation3 + $0x41] sm:$0xff]
        %v878 = vld [vmem:[#allocation3 + $0x51] sm:$0xff]
        %v879 = vld [vmem:[#allocation3 + $0x61] sm:$0xff]
        %v880 = vld [vmem:[#allocation3 + $0x71] sm:$0xff]
        %v881 = vld [vmem:[#allocation3 + $0x2] sm:$0xff]
        %v882 = vld [vmem:[#allocation3 + $0x12] sm:$0xff]
        %v883 = vld [vmem:[#allocation3 + $0x22] sm:$0xff]
        %v884 = vld [vmem:[#allocation3 + $0x32] sm:$0xff]
        %v885 = vld [vmem:[#allocation3 + $0x42] sm:$0xff]
        %v886 = vld [vmem:[#allocation3 + $0x52] sm:$0xff]
        %v887 = vld [vmem:[#allocation3 + $0x62] sm:$0xff]
        %v888 = vld [vmem:[#allocation3 + $0x72] sm:$0xff]
        %v889 = vld [vmem:[%s856] sm:$0xff]
        %v890 = vld [vmem:[%s856 + $0x10] sm:$0xff]
        %v891 = vld [vmem:[%s856 + $0x20] sm:$0xff]
        %v892 = vld [vmem:[%s856 + $0x30] sm:$0xff]
        %v893 = vld [vmem:[%s856 + $0x40] sm:$0xff]
        %v894 = vld [vmem:[%s856 + $0x50] sm:$0xff]
        %v895 = vld [vmem:[%s856 + $0x60] sm:$0xff]
        %v896 = vld [vmem:[%s856 + $0x70] sm:$0xff]
        %v897 = vld [vmem:[%s856 + $0x1] sm:$0xff]
        %v898 = vld [vmem:[%s856 + $0x11] sm:$0xff]
        %v899 = vld [vmem:[%s856 + $0x21] sm:$0xff]
        %v900 = vld [vmem:[%s856 + $0x31] sm:$0xff]
        %v901 = vld [vmem:[%s856 + $0x41] sm:$0xff]
        %v902 = vld [vmem:[%s856 + $0x51] sm:$0xff]
        %v903 = vld [vmem:[%s856 + $0x61] sm:$0xff]
        %v904 = vld [vmem:[%s856 + $0x71] sm:$0xff]
        %v905 = vld [vmem:[%s856 + $0x2] sm:$0xff]
        %v906 = vld [vmem:[%s856 + $0x12] sm:$0xff]
        %v907 = vld [vmem:[%s856 + $0x22] sm:$0xff]
        %v908 = vld [vmem:[%s856 + $0x32] sm:$0xff]
        %v909 = vld [vmem:[%s856 + $0x42] sm:$0xff]
        %v910 = vld [vmem:[%s856 + $0x52] sm:$0xff]
        %v911 = vld [vmem:[%s856 + $0x62] sm:$0xff]
        %v912 = vld [vmem:[%s856 + $0x72] sm:$0xff]
        %s913 = scalar_lea.vmem [#allocation3], 32
        %v914 = vld [vmem:[%s913] sm:$0xff]
        %v915 = vld [vmem:[%s913 + $0x10] sm:$0xff]
        %v916 = vld [vmem:[%s913 + $0x20] sm:$0xff]
        %v917 = vld [vmem:[%s913 + $0x30] sm:$0xff]
        %v918 = vld [vmem:[%s913 + $0x40] sm:$0xff]
        %v919 = vld [vmem:[%s913 + $0x50] sm:$0xff]
        %v920 = vld [vmem:[%s913 + $0x60] sm:$0xff]
        %v921 = vld [vmem:[%s913 + $0x70] sm:$0xff]
        %v922 = vld [vmem:[%s913 + $0x1] sm:$0xff]
        %v923 = vld [vmem:[%s913 + $0x11] sm:$0xff]
        %v924 = vld [vmem:[%s913 + $0x21] sm:$0xff]
        %v925 = vld [vmem:[%s913 + $0x31] sm:$0xff]
        %v926 = vld [vmem:[%s913 + $0x41] sm:$0xff]
        %v927 = vld [vmem:[%s913 + $0x51] sm:$0xff]
        %v928 = vld [vmem:[%s913 + $0x61] sm:$0xff]
        %v929 = vld [vmem:[%s913 + $0x71] sm:$0xff]
        %v930 = vld [vmem:[%s913 + $0x2] sm:$0xff]
        %v931 = vld [vmem:[%s913 + $0x12] sm:$0xff]
        %v932 = vld [vmem:[%s913 + $0x22] sm:$0xff]
        %v933 = vld [vmem:[%s913 + $0x32] sm:$0xff]
        %v934 = vld [vmem:[%s913 + $0x42] sm:$0xff]
        %v935 = vld [vmem:[%s913 + $0x52] sm:$0xff]
        %v936 = vld [vmem:[%s913 + $0x62] sm:$0xff]
        %v937 = vld [vmem:[%s913 + $0x72] sm:$0xff]
        %946 = vrot.lane.b32.xlu0 %v873, 8
        %v947 = vpop.permute.xlu0 %946
        %948 = vrot.lane.b32.xlu0 %v874, 8
        %v949 = vpop.permute.xlu0 %948
        %950 = vrot.lane.b32.xlu0 %v875, 8
        %v951 = vpop.permute.xlu0 %950
        %952 = vrot.lane.b32.xlu0 %v876, 8
        %v953 = vpop.permute.xlu0 %952
        %954 = vrot.lane.b32.xlu0 %v877, 8
        %v955 = vpop.permute.xlu0 %954
        %956 = vrot.lane.b32.xlu0 %v878, 8
        %v957 = vpop.permute.xlu0 %956
        %958 = vrot.lane.b32.xlu0 %v879, 8
        %v959 = vpop.permute.xlu0 %958
        %960 = vrot.lane.b32.xlu0 %v880, 8
        %v961 = vpop.permute.xlu0 %960
        %978 = vrot.lane.b32.xlu0 %v881, 16
        %v979 = vpop.permute.xlu0 %978
        %980 = vrot.lane.b32.xlu0 %v882, 16
        %v981 = vpop.permute.xlu0 %980
        %982 = vrot.lane.b32.xlu0 %v883, 16
        %v983 = vpop.permute.xlu0 %982
        %984 = vrot.lane.b32.xlu0 %v884, 16
        %v985 = vpop.permute.xlu0 %984
        %986 = vrot.lane.b32.xlu0 %v885, 16
        %v987 = vpop.permute.xlu0 %986
        %988 = vrot.lane.b32.xlu0 %v886, 16
        %v989 = vpop.permute.xlu0 %988
        %990 = vrot.lane.b32.xlu0 %v887, 16
        %v991 = vpop.permute.xlu0 %990
        %992 = vrot.lane.b32.xlu0 %v888, 16
        %v993 = vpop.permute.xlu0 %992
        %1010 = vrot.lane.b32.xlu0 %v889, 24
        %v1011 = vpop.permute.xlu0 %1010
        %1012 = vrot.lane.b32.xlu0 %v890, 24
        %v1013 = vpop.permute.xlu0 %1012
        %1014 = vrot.lane.b32.xlu0 %v891, 24
        %v1015 = vpop.permute.xlu0 %1014
        %1016 = vrot.lane.b32.xlu0 %v892, 24
        %v1017 = vpop.permute.xlu0 %1016
        %1018 = vrot.lane.b32.xlu0 %v893, 24
        %v1019 = vpop.permute.xlu0 %1018
        %1020 = vrot.lane.b32.xlu0 %v894, 24
        %v1021 = vpop.permute.xlu0 %1020
        %1022 = vrot.lane.b32.xlu0 %v895, 24
        %v1023 = vpop.permute.xlu0 %1022
        %1024 = vrot.lane.b32.xlu0 %v896, 24
        %v1025 = vpop.permute.xlu0 %1024
        %1042 = vrot.lane.b32.xlu0 %v897, 32
        %v1043 = vpop.permute.xlu0 %1042
        %1044 = vrot.lane.b32.xlu0 %v898, 32
        %v1045 = vpop.permute.xlu0 %1044
        %1046 = vrot.lane.b32.xlu0 %v899, 32
        %v1047 = vpop.permute.xlu0 %1046
        %1048 = vrot.lane.b32.xlu0 %v900, 32
        %v1049 = vpop.permute.xlu0 %1048
        %1050 = vrot.lane.b32.xlu0 %v901, 32
        %v1051 = vpop.permute.xlu0 %1050
        %1052 = vrot.lane.b32.xlu0 %v902, 32
        %v1053 = vpop.permute.xlu0 %1052
        %1054 = vrot.lane.b32.xlu0 %v903, 32
        %v1055 = vpop.permute.xlu0 %1054
        %1056 = vrot.lane.b32.xlu0 %v904, 32
        %v1057 = vpop.permute.xlu0 %1056
        %1074 = vrot.lane.b32.xlu0 %v905, 40
        %v1075 = vpop.permute.xlu0 %1074
        %1076 = vrot.lane.b32.xlu0 %v906, 40
        %v1077 = vpop.permute.xlu0 %1076
        %1078 = vrot.lane.b32.xlu0 %v907, 40
        %v1079 = vpop.permute.xlu0 %1078
        %1080 = vrot.lane.b32.xlu0 %v908, 40
        %v1081 = vpop.permute.xlu0 %1080
        %1082 = vrot.lane.b32.xlu0 %v909, 40
        %v1083 = vpop.permute.xlu0 %1082
        %1084 = vrot.lane.b32.xlu0 %v910, 40
        %v1085 = vpop.permute.xlu0 %1084
        %1086 = vrot.lane.b32.xlu0 %v911, 40
        %v1087 = vpop.permute.xlu0 %1086
        %1088 = vrot.lane.b32.xlu0 %v912, 40
        %v1089 = vpop.permute.xlu0 %1088
        %1106 = vrot.lane.b32.xlu0 %v914, 48
        %v1107 = vpop.permute.xlu0 %1106
        %1108 = vrot.lane.b32.xlu0 %v915, 48
        %v1109 = vpop.permute.xlu0 %1108
        %1110 = vrot.lane.b32.xlu0 %v916, 48
        %v1111 = vpop.permute.xlu0 %1110
        %1112 = vrot.lane.b32.xlu0 %v917, 48
        %v1113 = vpop.permute.xlu0 %1112
        %1114 = vrot.lane.b32.xlu0 %v918, 48
        %v1115 = vpop.permute.xlu0 %1114
        %1116 = vrot.lane.b32.xlu0 %v919, 48
        %v1117 = vpop.permute.xlu0 %1116
        %1118 = vrot.lane.b32.xlu0 %v920, 48
        %v1119 = vpop.permute.xlu0 %1118
        %1120 = vrot.lane.b32.xlu0 %v921, 48
        %v1121 = vpop.permute.xlu0 %1120
        %1138 = vrot.lane.b32.xlu0 %v922, 56
        %v1139 = vpop.permute.xlu0 %1138
        %1140 = vrot.lane.b32.xlu0 %v923, 56
        %v1141 = vpop.permute.xlu0 %1140
        %1142 = vrot.lane.b32.xlu0 %v924, 56
        %v1143 = vpop.permute.xlu0 %1142
        %1144 = vrot.lane.b32.xlu0 %v925, 56
        %v1145 = vpop.permute.xlu0 %1144
        %1146 = vrot.lane.b32.xlu0 %v926, 56
        %v1147 = vpop.permute.xlu0 %1146
        %1148 = vrot.lane.b32.xlu0 %v927, 56
        %v1149 = vpop.permute.xlu0 %1148
        %1150 = vrot.lane.b32.xlu0 %v928, 56
        %v1151 = vpop.permute.xlu0 %1150
        %1152 = vrot.lane.b32.xlu0 %v929, 56
        %v1153 = vpop.permute.xlu0 %1152
        %1170 = vrot.lane.b32.xlu0 %v930, 64
        %v1171 = vpop.permute.xlu0 %1170
        %1172 = vrot.lane.b32.xlu0 %v931, 64
        %v1173 = vpop.permute.xlu0 %1172
        %1174 = vrot.lane.b32.xlu0 %v932, 64
        %v1175 = vpop.permute.xlu0 %1174
        %1176 = vrot.lane.b32.xlu0 %v933, 64
        %v1177 = vpop.permute.xlu0 %1176
        %1178 = vrot.lane.b32.xlu0 %v934, 64
        %v1179 = vpop.permute.xlu0 %1178
        %1180 = vrot.lane.b32.xlu0 %v935, 64
        %v1181 = vpop.permute.xlu0 %1180
        %1182 = vrot.lane.b32.xlu0 %v936, 64
        %v1183 = vpop.permute.xlu0 %1182
        %1184 = vrot.lane.b32.xlu0 %v937, 64
        %v1185 = vpop.permute.xlu0 %1184
        %v1194 = vsel %vm684, %v865, %v947
        %v1195 = vsel %vm684, %v866, %v949
        %v1196 = vsel %vm684, %v867, %v951
        %v1197 = vsel %vm684, %v868, %v953
        %v1198 = vsel %vm684, %v869, %v955
        %v1199 = vsel %vm684, %v870, %v957
        %v1200 = vsel %vm684, %v871, %v959
        %v1201 = vsel %vm684, %v872, %v961
        %v1202 = vsel %vm702, %v1194, %v979
        %v1203 = vsel %vm702, %v1195, %v981
        %v1204 = vsel %vm702, %v1196, %v983
        %v1205 = vsel %vm702, %v1197, %v985
        %v1206 = vsel %vm702, %v1198, %v987
        %v1207 = vsel %vm702, %v1199, %v989
        %v1208 = vsel %vm702, %v1200, %v991
        %v1209 = vsel %vm702, %v1201, %v993
        %v1210 = vsel %vm720, %v1202, %v1011
        %v1211 = vsel %vm720, %v1203, %v1013
        %v1212 = vsel %vm720, %v1204, %v1015
        %v1213 = vsel %vm720, %v1205, %v1017
        %v1214 = vsel %vm720, %v1206, %v1019
        %v1215 = vsel %vm720, %v1207, %v1021
        %v1216 = vsel %vm720, %v1208, %v1023
        %v1217 = vsel %vm720, %v1209, %v1025
        %v1218 = vsel %vm738, %v1210, %v1043
        %v1219 = vsel %vm738, %v1211, %v1045
        %v1220 = vsel %vm738, %v1212, %v1047
        %v1221 = vsel %vm738, %v1213, %v1049
        %v1222 = vsel %vm738, %v1214, %v1051
        %v1223 = vsel %vm738, %v1215, %v1053
        %v1224 = vsel %vm738, %v1216, %v1055
        %v1225 = vsel %vm738, %v1217, %v1057
        %vm1226 = vcmask 326656
        %v1227 = vsel %vm1226, %v1218, %v1075
        %v1228 = vsel %vm1226, %v1219, %v1077
        %v1229 = vsel %vm1226, %v1220, %v1079
        %v1230 = vsel %vm1226, %v1221, %v1081
        %v1231 = vsel %vm1226, %v1222, %v1083
        %v1232 = vsel %vm1226, %v1223, %v1085
        %v1233 = vsel %vm1226, %v1224, %v1087
        %v1234 = vsel %vm1226, %v1225, %v1089
        %vm1235 = vcmask 392192
        %v1236 = vsel %vm1235, %v1227, %v1107
        %v1237 = vsel %vm1235, %v1228, %v1109
        %v1238 = vsel %vm1235, %v1229, %v1111
        %v1239 = vsel %vm1235, %v1230, %v1113
        %v1240 = vsel %vm1235, %v1231, %v1115
        %v1241 = vsel %vm1235, %v1232, %v1117
        %v1242 = vsel %vm1235, %v1233, %v1119
        %v1243 = vsel %vm1235, %v1234, %v1121
        %vm1244 = vcmask 457728
        %v1245 = vsel %vm1244, %v1236, %v1139
        %v1246 = vsel %vm1244, %v1237, %v1141
        %v1247 = vsel %vm1244, %v1238, %v1143
        %v1248 = vsel %vm1244, %v1239, %v1145
        %v1249 = vsel %vm1244, %v1240, %v1147
        %v1250 = vsel %vm1244, %v1241, %v1149
        %v1251 = vsel %vm1244, %v1242, %v1151
        %v1252 = vsel %vm1244, %v1243, %v1153
        %vm1253 = vcmask 523264
        %v1254 = vsel %vm1253, %v1245, %v1171
        %v1255 = vsel %vm1253, %v1246, %v1173
        %v1256 = vsel %vm1253, %v1247, %v1175
        %v1257 = vsel %vm1253, %v1248, %v1177
        %v1258 = vsel %vm1253, %v1249, %v1179
        %v1259 = vsel %vm1253, %v1250, %v1181
        %v1260 = vsel %vm1253, %v1251, %v1183
        %v1261 = vsel %vm1253, %v1252, %v1185
        %v1262 = vpack.c.bf16 %v1255, %v1254
        %v1263 = vpack.c.bf16 %v1257, %v1256
        %v1264 = vpack.c.bf16 %v1259, %v1258
        %v1265 = vpack.c.bf16 %v1261, %v1260
        %v1266 = vld [vmem:[%s3] sm:$0xf]
        %v1267 = vld [vmem:[%s3 + $0x4] sm:$0xf]
        %v1268 = vld [vmem:[%s3 + $0x8] sm:$0xf]
        %v1269 = vld [vmem:[%s3 + $0xc] sm:$0xf]
        %v1270 = vld [vmem:[%s3 + $0x10] sm:$0xf]
        %v1271 = vld [vmem:[%s3 + $0x14] sm:$0xf]
        %v1272 = vld [vmem:[%s3 + $0x18] sm:$0xf]
        %v1273 = vld [vmem:[%s3 + $0x1c] sm:$0xf]
        %v1274 = vld [vmem:[%s3 + $0x20] sm:$0xf]
        %v1275 = vld [vmem:[%s4] sm:$0x1]
        %v1277 = vperm.slane %v1275, 0
        %v1288 = vunpack.c.l.b16 %v1266
        %v1289 = vunpack.c.l.b16 %v1267
        %v1290 = vunpack.c.l.b16 %v1268
        %v1291 = vunpack.c.l.b16 %v1269
        %v1292 = vunpack.c.l.b16 %v1270
        %v1293 = vunpack.c.l.b16 %v1271
        %v1294 = vunpack.c.l.b16 %v1272
        %v1295 = vunpack.c.l.b16 %v1273
        %v1296 = vunpack.c.l.b16 %v1274
        %v1297 = vpack.c.b16 %v1289, %v1288
        %v1298 = vpack.c.b16 %v1291, %v1290
        %v1299 = vpack.c.b16 %v1293, %v1292
        %v1300 = vpack.c.b16 %v1295, %v1294
        %v1301 = vpack.c.b16 %v1296, %v1296
        %vm1306 = vcmask 588800
        %v1308 = vsel %vm1306, %v1262, 0
        %v1311 = vsel %vm1306, %v1263, 0
        %v1314 = vsel %vm1306, %v1264, 0
        %v1317 = vsel %vm1306, %v1265, 0
        %vm1319 = vcmask 1043456
        %v1321 = vsel %vm1319, %v1301, 0
        %1323 = vmatpush.bf16.msra.mxu0 0
        %1324 = vmatpush.bf16.msra.mxu0 0
        %1325 = vmatpush.bf16.msra.mxu0 0
        %1326 = vmatpush.bf16.msra.mxu0 %v1321
        %1327 = vmatpush.bf16.msra.mxu0 %v1300
        %1328 = vmatpush.bf16.msra.mxu0 %v1299
        %1329 = vmatpush.bf16.msra.mxu0 %v1298
        %1330 = vmatpush.bf16.msra.mxu0 %v1297
        %1331 = vmatmul.bf16.gmra.mxu0 %v1308
        %v1332 = vpop.f32.mrf.mxu0
        %v1333 = vadd.f32 %v1277, %v1332
        %v1334 = vpop.f32.mrf.mxu0
        %v1335 = vadd.f32 %v1277, %v1334
        %1336 = vmatmul.bf16.gmra.mxu0 %v1311
        %v1337 = vpop.f32.mrf.mxu0
        %v1338 = vadd.f32 %v1277, %v1337
        %v1339 = vpop.f32.mrf.mxu0
        %v1340 = vadd.f32 %v1277, %v1339
        %1341 = vmatmul.bf16.gmra.mxu0 %v1314
        %v1342 = vpop.f32.mrf.mxu0
        %v1343 = vadd.f32 %v1277, %v1342
        %v1344 = vpop.f32.mrf.mxu0
        %v1345 = vadd.f32 %v1277, %v1344
        %1346 = vmatmul.bf16.gmra.mxu0 %v1317
        %v1347 = vpop.f32.mrf.mxu0
        %v1348 = vadd.f32 %v1277, %v1347
        %v1349 = vpop.f32.mrf.mxu0
        %v1350 = vadd.f32 %v1277, %v1349
        %1351 = vdwg.mxu0
        %v1352 = vmax.f32 %v1333, 0.0
        %v1353 = vmax.f32 %v1335, 0.0
        %v1354 = vmax.f32 %v1338, 0.0
        %v1355 = vmax.f32 %v1340, 0.0
        %v1356 = vmax.f32 %v1343, 0.0
        %v1357 = vmax.f32 %v1345, 0.0
        %v1358 = vmax.f32 %v1348, 0.0
        %v1359 = vmax.f32 %v1350, 0.0
        %1360 = vxpose.xlu0.b32.start [1/16] %v1352, 128
        %1361 = vxpose.xlu0.b32.cont [2/16] %v1353, 128
        %1362 = vxpose.xlu0.b32.cont [3/16] %v1354, 128
        %1363 = vxpose.xlu0.b32.cont [4/16] %v1355, 128
        %1364 = vxpose.xlu0.b32.cont [5/16] %v1356, 128
        %1365 = vxpose.xlu0.b32.cont [6/16] %v1357, 128
        %1366 = vxpose.xlu0.b32.cont [7/16] %v1358, 128
        %1367 = vxpose.xlu0.b32.cont [8/16] %v1359, 128
        %1368 = vxpose.xlu0.b32.cont [9/16] 0.0, 128
        %1369 = vxpose.xlu0.b32.cont [10/16] 0.0, 128
        %1370 = vxpose.xlu0.b32.cont [11/16] 0.0, 128
        %1371 = vxpose.xlu0.b32.cont [12/16] 0.0, 128
        %1372 = vxpose.xlu0.b32.cont [13/16] 0.0, 128
        %1373 = vxpose.xlu0.b32.cont [14/16] 0.0, 128
        %1374 = vxpose.xlu0.b32.cont [15/16] 0.0, 128
        %1375 = vxpose.xlu0.b32.end [16/16] 0.0, 128
        %v1376 = vpop.trf.xlu0
        %v1377 = vpop.trf.xlu0
        %v1378 = vpop.trf.xlu0
        %v1379 = vpop.trf.xlu0
        %v1380 = vpop.trf.xlu0
        %v1381 = vpop.trf.xlu0
        %v1382 = vpop.trf.xlu0
        %v1383 = vpop.trf.xlu0
        %v1384 = vpop.trf.xlu0
        %v1385 = vpop.trf.xlu0
        %v1386 = vpop.trf.xlu0
        %v1387 = vpop.trf.xlu0
        %v1388 = vpop.trf.xlu0
        %v1389 = vpop.trf.xlu0
        %v1390 = vpop.trf.xlu0
        %v1391 = vpop.trf.xlu0
        %1392 = vst.msk [vmem:[%s244] sm:$0xff] %vm1253, %v1376
        %s1393 = sand.u32 %s140, 1
        %s1394 = scalar_lea.sflag [#allocation6], %s1393
        %s1395 = sand.u32 %s140, 1
        %s1396 = smul.addr %s1395, 8
        %s1397 = scalar_lea.vmem [#allocation7], %s1396
        // Predicated region
        $region45: #{tpu_custom_call.1} parent=39 // pred_check
          %p1398 = pneg %p150
        $region46: #{tpu_custom_call.1} parent=39 // pred_check_branch
          %1400 = sbr.rel (%p1398) target = $region48
        $region47: #{tpu_custom_call.1} parent=39 // pred_region
          %1402 = vsyncadd %s1394, 0
          %s1403 = smul.addr %s22, 8
          %s1404 = scalar_lea.hbm %s5, %s1403
          %s1406 = sshll.u32 %s1397, 4
          %s1407 = int_to_ptr.vmem [resolvable:$true] %s1406
          %s1408 = sshll.u32 %s1404, 4
          %s1409 = int_to_ptr.hbm [resolvable:$true] %s1408
          %1411 = dma.vmem_to_hbm [thread:$0]  %s1407, 128, %s1409, %s1394
        $region48: #{tpu_custom_call.1} parent=39 // pred_fallthru
          _
      $region40: #{tpu_custom_call.1} parent=5 // pred_fallthru
        _
      %p1412 = scmp.le.s32.totalorder 2, %s17
      // Predicated region
      $region49: #{tpu_custom_call.1} parent=5 // pred_check
        %p1413 = pneg %p1412
      $region50: #{tpu_custom_call.1} parent=5 // pred_check_branch
        %1415 = sbr.rel (%p1413) target = $region52
      $region51: #{tpu_custom_call.1} parent=5 // pred_region
        %s1416 = ssub.s32 %s17, 2
        // Predicated region
        $region53: #{tpu_custom_call.1} parent=51 // pred_check
          %p1417 = pneg %p156
        $region54: #{tpu_custom_call.1} parent=51 // pred_check_branch
          %1419 = sbr.rel (%p1417) target = $region56
        $region55: #{tpu_custom_call.1} parent=51 // pred_region
          %s1420 = sand.u32 %s141, 1
          %s1421 = scalar_lea.sflag [#allocation6], %s1420
          %s1422 = sand.u32 %s141, 1
          %s1423 = smul.addr %s1422, 8
          %s1424 = scalar_lea.vmem [#allocation7], %s1423
          %1426 = dma.done %s1421, 128
        $region56: #{tpu_custom_call.1} parent=51 // pred_fallthru
          _
      $region52: #{tpu_custom_call.1} parent=5 // pred_fallthru
        _
    $region6: #{tpu_custom_call.1} parent=1 // loop_footer
      %s21 = sadd.s32 1, %s17
    $region7: #{tpu_custom_call.1} parent=1 // loop_footer_branch
      %16 = sbr.rel target = $region3
    $region8: #{tpu_custom_call.1} parent=1 // loop_exit
      _
    %1427 = vsyncpa [#allocation5], 1
    %s1428 = scalar_lea.sflag [#allocation5], 1
    %1429 = vsyncpa %s1428, 1
    %1430 = vsyncpa [#allocation6], 1
    %s1431 = scalar_lea.sflag [#allocation6], 1
    %1432 = vsyncpa %s1431, 1

</llo_original>
